<compile_context>
chip_gen: v6e
topology: v6e:2x2x1
jax: 0.10.0
libtpu: 0.0.40
codegen_flags: <defaults>
</compile_context>

<pallas_src>
import functools
import math

import jax
import jax.numpy as jnp
from jax.experimental import pallas as pl
from jax.experimental.pallas import tpu as pltpu


def _resnet_block_mlp_kernel(
    x_ref, t_ref,
    wts_ref, bts_ref, wtsh_ref, btsh_ref,     # time-MLP, split into scale/shift halves
    w1_ref, b1_ref, g1_ref, be1_ref,          # block1: proj + GroupNorm affine
    w2_ref, b2_ref, g2_ref, be2_ref,          # block2: proj + GroupNorm affine
    wres_ref, bres_ref,                       # residual Linear (identity handled in wrapper)
    gmat_ref, gmatt_ref,                      # group one-hot (C,G) and its transpose (G,C)
    o_ref,
    *, inv_group_size, eps,
):
    f32 = jnp.float32
    x = x_ref[...].astype(f32)        # (TB, dim)
    t = t_ref[...].astype(f32)        # (TB, tdim)
    gmat = gmat_ref[...]              # (dim_out, groups)
    gmatt = gmatt_ref[...]            # (groups, dim_out)

    def silu(v):
        return v * jax.nn.sigmoid(v)

    def group_norm(h, gamma, beta):
        # Per-(row, group) mean via MXU dot with the one-hot group matrix,
        # broadcast back to channels with the transpose.
        mean_g = jnp.dot(h, gmat, preferred_element_type=f32) * inv_group_size      # (TB, G)
        mean_c = jnp.dot(mean_g, gmatt, preferred_element_type=f32)                 # (TB, C)
        cen = h - mean_c
        var_g = jnp.dot(cen * cen, gmat, preferred_element_type=f32) * inv_group_size
        inv_std_c = jnp.dot(jax.lax.rsqrt(var_g + eps), gmatt,
                            preferred_element_type=f32)                             # (TB, C)
        return cen * inv_std_c * gamma + beta

    # ---- time embedding MLP: SiLU -> Linear, split into (scale, shift) ----
    t_act = silu(t)
    scale = jnp.dot(t_act, wts_ref[...].astype(f32),
                    preferred_element_type=f32) + bts_ref[...].astype(f32)           # (TB, C)
    shift = jnp.dot(t_act, wtsh_ref[...].astype(f32),
                    preferred_element_type=f32) + btsh_ref[...].astype(f32)          # (TB, C)

    # ---- block1: Linear -> GroupNorm -> scale/shift -> SiLU ----
    h = jnp.dot(x, w1_ref[...].astype(f32),
                preferred_element_type=f32) + b1_ref[...].astype(f32)
    h = group_norm(h, g1_ref[...].astype(f32), be1_ref[...].astype(f32))
    h = h * (scale + 1.0) + shift
    h = silu(h)

    # ---- block2: Linear -> GroupNorm -> SiLU ----
    h = jnp.dot(h, w2_ref[...].astype(f32),
                preferred_element_type=f32) + b2_ref[...].astype(f32)
    h = group_norm(h, g2_ref[...].astype(f32), be2_ref[...].astype(f32))
    h = silu(h)

    # ---- residual Linear ----
    res = jnp.dot(x, wres_ref[...].astype(f32),
                  preferred_element_type=f32) + bres_ref[...].astype(f32)
    o_ref[...] = (h + res).astype(o_ref.dtype)


def resnet_block_mlp(x, time_emb, params, *, groups=8, block_b=256):
    """x: (B, dim), time_emb: (B, time_emb_dim) or None  ->  (B, dim_out)."""
    B, dim = x.shape
    dim_out = params["w1"].shape[0]
    assert dim_out % groups == 0
    gs = dim_out // groups
    f32 = jnp.float32

    # time_emb=None in PyTorch skips the scale/shift; x*(0+1)+0 is the identity,
    # so feeding a zero time-MLP reproduces that path exactly.
    if time_emb is None:
        time_emb = jnp.zeros((B, 8), x.dtype)
        w_mlp = jnp.zeros((2 * dim_out, 8), f32)
        b_mlp = jnp.zeros((2 * dim_out,), f32)
    else:
        w_mlp, b_mlp = params["w_mlp"], params["b_mlp"]
    tdim = time_emb.shape[1]

    # Pre-transpose weights (kernel does x @ W) and split the time-MLP into its
    # scale / shift halves so the kernel never slices below a lane boundary.
    w_mlp_t = jnp.transpose(w_mlp)                 # (tdim, 2*dim_out)
    wt_scale = w_mlp_t[:, :dim_out]
    wt_shift = w_mlp_t[:, dim_out:]
    bt_scale = b_mlp[:dim_out].reshape(1, dim_out)
    bt_shift = b_mlp[dim_out:].reshape(1, dim_out)

    w1_t = jnp.transpose(params["w1"])             # (dim, dim_out)
    w2_t = jnp.transpose(params["w2"])             # (dim_out, dim_out)
    if params.get("w_res") is not None:
        wres_t = jnp.transpose(params["w_res"])    # (dim, dim_out)
        bres = params["b_res"].reshape(1, dim_out)
    else:
        # dim == dim_out -> nn.Identity(); x @ I == x exactly in f32.
        wres_t = jnp.eye(dim, dtype=f32)
        bres = jnp.zeros((1, dim_out), f32)

    b1 = params["b1"].reshape(1, dim_out)
    g1 = params["g1"].reshape(1, dim_out)
    be1 = params["be1"].reshape(1, dim_out)
    b2 = params["b2"].reshape(1, dim_out)
    g2 = params["g2"].reshape(1, dim_out)
    be2 = params["be2"].reshape(1, dim_out)

    # One-hot group-membership matrix for the GroupNorm reductions.
    gmat = jax.nn.one_hot(jnp.arange(dim_out) // gs, groups, dtype=f32)   # (C, G)
    gmat_t = jnp.transpose(gmat)                                          # (G, C)

    # ---- batch tiling: TB rows per grid step (multiple of 8 sublanes) ----
    if B <= block_b:
        TB, B_pad = B, B
    else:
        TB = block_b
        B_pad = pl.cdiv(B, TB) * TB
    if B_pad != B:
        pad = B_pad - B
        x_p = jnp.pad(x, ((0, pad), (0, 0)))
        t_p = jnp.pad(time_emb, ((0, pad), (0, 0)))
    else:
        x_p, t_p = x, time_emb
    grid = (B_pad // TB,)

    def batch_spec(feat):
        return pl.BlockSpec((TB, feat), lambda b: (b, 0))

    def full_spec(shape):
        return pl.BlockSpec(shape, lambda b: (0,) * len(shape))

    kernel = functools.partial(
        _resnet_block_mlp_kernel, inv_group_size=1.0 / gs, eps=1e-5)

    out = pl.pallas_call(
        kernel,
        out_shape=jax.ShapeDtypeStruct((B_pad, dim_out), x.dtype),
        grid_spec=pltpu.PrefetchScalarGridSpec(
            num_scalar_prefetch=0,
            grid=grid,
            in_specs=[
                batch_spec(dim),                       # x
                batch_spec(tdim),                      # time_emb
                full_spec((tdim, dim_out)),            # wt_scale
                full_spec((1, dim_out)),               # bt_scale
                full_spec((tdim, dim_out)),            # wt_shift
                full_spec((1, dim_out)),               # bt_shift
                full_spec((dim, dim_out)),             # w1_t
                full_spec((1, dim_out)),               # b1
                full_spec((1, dim_out)),               # g1
                full_spec((1, dim_out)),               # be1
                full_spec((dim_out, dim_out)),         # w2_t
                full_spec((1, dim_out)),               # b2
                full_spec((1, dim_out)),               # g2
                full_spec((1, dim_out)),               # be2
                full_spec((dim, dim_out)),             # wres_t
                full_spec((1, dim_out)),               # bres
                full_spec((dim_out, groups)),          # gmat
                full_spec((groups, dim_out)),          # gmat_t
            ],
            out_specs=pl.BlockSpec((TB, dim_out), lambda b: (b, 0)),
        ),
        compiler_params=pltpu.CompilerParams(
            dimension_semantics=("parallel",),          # lets v7x megacore shard batch tiles
            vmem_limit_bytes=48 * 1024 * 1024,          # below v7x's 64 MiB physical VMEM
        ),
    )(x_p, t_p, wt_scale, bt_scale, wt_shift, bt_shift,
      w1_t, b1, g1, be1, w2_t, b2, g2, be2, wres_t, bres, gmat, gmat_t)

    return out[:B]


def _reference(x, time_emb, params, groups):
    """Pure-JAX reference matching the PyTorch module."""
    dim_out = params["w1"].shape[0]
    t = jax.nn.silu(time_emb) @ params["w_mlp"].T + params["b_mlp"]
    scale, shift = t[:, :dim_out], t[:, dim_out:]

    def gn(h, gamma, beta):
        Bn, C = h.shape
        hg = h.reshape(Bn, groups, C // groups)
        mean = hg.mean(axis=2, keepdims=True)
        var = hg.var(axis=2, keepdims=True)
        hg = (hg - mean) * jax.lax.rsqrt(var + 1e-5)
        return hg.reshape(Bn, C) * gamma + beta

    h = x @ params["w1"].T + params["b1"]
    h = gn(h, params["g1"], params["be1"])
    h = h * (scale + 1.0) + shift
    h = jax.nn.silu(h)
    h = h @ params["w2"].T + params["b2"]
    h = gn(h, params["g2"], params["be2"])
    h = jax.nn.silu(h)
    res = x @ params["w_res"].T + params["b_res"]
    return h + res


if __name__ == "__main__":
    B, dim, dim_out, tdim, groups = 16, 32, 64, 16, 8

    key = jax.random.PRNGKey(0)
    keys = jax.random.split(key, 10)

    def init(k, shape, fan_in):
        bound = 1.0 / math.sqrt(fan_in)
        return jax.random.uniform(k, shape, jnp.float32, -bound, bound)

    params = {
        "w_mlp": init(keys[0], (2 * dim_out, tdim), tdim),
        "b_mlp": init(keys[1], (2 * dim_out,), tdim),
        "w1": init(keys[2], (dim_out, dim), dim),
        "b1": init(keys[3], (dim_out,), dim),
        "g1": jnp.ones((dim_out,), jnp.float32),
        "be1": jnp.zeros((dim_out,), jnp.float32),
        "w2": init(keys[4], (dim_out, dim_out), dim_out),
        "b2": init(keys[5], (dim_out,), dim_out),
        "g2": jnp.ones((dim_out,), jnp.float32),
        "be2": jnp.zeros((dim_out,), jnp.float32),
        "w_res": init(keys[6], (dim_out, dim), dim),   # dim != dim_out -> Linear res_conv
        "b_res": init(keys[7], (dim_out,), dim),
    }

    x = jax.random.normal(keys[8], (B, dim), jnp.float32)
    time_emb = jax.random.normal(keys[9], (B, tdim), jnp.float32)

    # block_b=8 exercises the batch-tiled grid (2 steps) even at toy size.
    out = resnet_block_mlp(x, time_emb, params, groups=groups, block_b=8)
    out = jax.block_until_ready(out)

    ref = _reference(x, time_emb, params, groups)
    assert out.shape == ref.shape
    assert jnp.allclose(out, ref, atol=1e-4, rtol=1e-4), "mismatch vs reference"

    print("KERNEL_OK")
</pallas_src>

<mosaic_0001>
module attributes {stable_mosaic.version = 11 : i64} {
  func.func @_resnet_block_mlp_kernel(%arg0: i32, %arg1: memref<8x32xf32, #tpu.memory_space<vmem>>, %arg2: memref<8x16xf32, #tpu.memory_space<vmem>>, %arg3: memref<16x64xf32, #tpu.memory_space<vmem>>, %arg4: memref<1x64xf32, #tpu.memory_space<vmem>>, %arg5: memref<16x64xf32, #tpu.memory_space<vmem>>, %arg6: memref<1x64xf32, #tpu.memory_space<vmem>>, %arg7: memref<32x64xf32, #tpu.memory_space<vmem>>, %arg8: memref<1x64xf32, #tpu.memory_space<vmem>>, %arg9: memref<1x64xf32, #tpu.memory_space<vmem>>, %arg10: memref<1x64xf32, #tpu.memory_space<vmem>>, %arg11: memref<64x64xf32, #tpu.memory_space<vmem>>, %arg12: memref<1x64xf32, #tpu.memory_space<vmem>>, %arg13: memref<1x64xf32, #tpu.memory_space<vmem>>, %arg14: memref<1x64xf32, #tpu.memory_space<vmem>>, %arg15: memref<32x64xf32, #tpu.memory_space<vmem>>, %arg16: memref<1x64xf32, #tpu.memory_space<vmem>>, %arg17: memref<64x8xf32, #tpu.memory_space<vmem>>, %arg18: memref<8x64xf32, #tpu.memory_space<vmem>>, %arg19: memref<8x64xf32, #tpu.memory_space<vmem>>) attributes {dimension_semantics = [#tpu.dimension_semantics<parallel>], iteration_bounds = array<i64: 2>, scalar_prefetch = 0 : i64, scratch_operands = 0 : i64, tpu.core_type = #tpu.core_type<tc>, window_params = [{transform_indices = @transform_0, window_bounds = array<i64: 8, 32>}, {transform_indices = @transform_1, window_bounds = array<i64: 8, 16>}, {pipeline_mode = #tpu.pipeline_mode<synchronous>, transform_indices = @transform_2, window_bounds = array<i64: 16, 64>}, {pipeline_mode = #tpu.pipeline_mode<synchronous>, transform_indices = @transform_3, window_bounds = array<i64: 1, 64>}, {pipeline_mode = #tpu.pipeline_mode<synchronous>, transform_indices = @transform_4, window_bounds = array<i64: 16, 64>}, {pipeline_mode = #tpu.pipeline_mode<synchronous>, transform_indices = @transform_5, window_bounds = array<i64: 1, 64>}, {pipeline_mode = #tpu.pipeline_mode<synchronous>, transform_indices = @transform_6, window_bounds = array<i64: 32, 64>}, {pipeline_mode = #tpu.pipeline_mode<synchronous>, transform_indices = @transform_7, window_bounds = array<i64: 1, 64>}, {pipeline_mode = #tpu.pipeline_mode<synchronous>, transform_indices = @transform_8, window_bounds = array<i64: 1, 64>}, {pipeline_mode = #tpu.pipeline_mode<synchronous>, transform_indices = @transform_9, window_bounds = array<i64: 1, 64>}, {pipeline_mode = #tpu.pipeline_mode<synchronous>, transform_indices = @transform_10, window_bounds = array<i64: 64, 64>}, {pipeline_mode = #tpu.pipeline_mode<synchronous>, transform_indices = @transform_11, window_bounds = array<i64: 1, 64>}, {pipeline_mode = #tpu.pipeline_mode<synchronous>, transform_indices = @transform_12, window_bounds = array<i64: 1, 64>}, {pipeline_mode = #tpu.pipeline_mode<synchronous>, transform_indices = @transform_13, window_bounds = array<i64: 1, 64>}, {pipeline_mode = #tpu.pipeline_mode<synchronous>, transform_indices = @transform_14, window_bounds = array<i64: 32, 64>}, {pipeline_mode = #tpu.pipeline_mode<synchronous>, transform_indices = @transform_15, window_bounds = array<i64: 1, 64>}, {pipeline_mode = #tpu.pipeline_mode<synchronous>, transform_indices = @transform_16, window_bounds = array<i64: 64, 8>}, {pipeline_mode = #tpu.pipeline_mode<synchronous>, transform_indices = @transform_17, window_bounds = array<i64: 8, 64>}, {transform_indices = @transform_18, window_bounds = array<i64: 8, 64>}]} {
    %c0 = arith.constant 0 : index
    %c0_0 = arith.constant 0 : index
    %0 = vector.load %arg1[%c0, %c0_0] : memref<8x32xf32, #tpu.memory_space<vmem>>, vector<8x32xf32>
    %c0_1 = arith.constant 0 : index
    %c0_2 = arith.constant 0 : index
    %1 = vector.load %arg2[%c0_1, %c0_2] : memref<8x16xf32, #tpu.memory_space<vmem>>, vector<8x16xf32>
    %c0_3 = arith.constant 0 : index
    %c0_4 = arith.constant 0 : index
    %2 = vector.load %arg17[%c0_3, %c0_4] : memref<64x8xf32, #tpu.memory_space<vmem>>, vector<64x8xf32>
    %c0_5 = arith.constant 0 : index
    %c0_6 = arith.constant 0 : index
    %3 = vector.load %arg18[%c0_5, %c0_6] : memref<8x64xf32, #tpu.memory_space<vmem>>, vector<8x64xf32>
    %4 = arith.negf %1 : vector<8x16xf32>
    %5 = math.exp %4 : vector<8x16xf32>
    %cst = arith.constant 1.000000e+00 : f32
    %6 = vector.broadcast %cst : f32 to vector<8x16xf32>
    %7 = arith.addf %6, %5 : vector<8x16xf32>
    %8 = arith.divf %6, %7 : vector<8x16xf32>
    %9 = arith.mulf %1, %8 : vector<8x16xf32>
    %c0_7 = arith.constant 0 : index
    %c0_8 = arith.constant 0 : index
    %10 = vector.load %arg3[%c0_7, %c0_8] : memref<16x64xf32, #tpu.memory_space<vmem>>, vector<16x64xf32>
    %cst_9 = arith.constant dense<0.000000e+00> : vector<8x64xf32>
    %11 = tpu.matmul %9, %10, %cst_9 {dimension_numbers = #tpu.dot_dimension_numbers<[1], [0], [0], [1], [0, 0, 1, 1], [], []>} : vector<8x16xf32>, vector<16x64xf32>, vector<8x64xf32> -> vector<8x64xf32>
    %c0_10 = arith.constant 0 : index
    %c0_11 = arith.constant 0 : index
    %12 = vector.load %arg4[%c0_10, %c0_11] : memref<1x64xf32, #tpu.memory_space<vmem>>, vector<1x64xf32>
    %13 = vector.broadcast %12 : vector<1x64xf32> to vector<8x64xf32>
    %14 = arith.addf %11, %13 : vector<8x64xf32>
    %c0_12 = arith.constant 0 : index
    %c0_13 = arith.constant 0 : index
    %15 = vector.load %arg5[%c0_12, %c0_13] : memref<16x64xf32, #tpu.memory_space<vmem>>, vector<16x64xf32>
    %cst_14 = arith.constant dense<0.000000e+00> : vector<8x64xf32>
    %16 = tpu.matmul %9, %15, %cst_14 {dimension_numbers = #tpu.dot_dimension_numbers<[1], [0], [0], [1], [0, 0, 1, 1], [], []>} : vector<8x16xf32>, vector<16x64xf32>, vector<8x64xf32> -> vector<8x64xf32>
    %c0_15 = arith.constant 0 : index
    %c0_16 = arith.constant 0 : index
    %17 = vector.load %arg6[%c0_15, %c0_16] : memref<1x64xf32, #tpu.memory_space<vmem>>, vector<1x64xf32>
    %18 = vector.broadcast %17 : vector<1x64xf32> to vector<8x64xf32>
    %19 = arith.addf %16, %18 : vector<8x64xf32>
    %c0_17 = arith.constant 0 : index
    %c0_18 = arith.constant 0 : index
    %20 = vector.load %arg7[%c0_17, %c0_18] : memref<32x64xf32, #tpu.memory_space<vmem>>, vector<32x64xf32>
    %cst_19 = arith.constant dense<0.000000e+00> : vector<8x64xf32>
    %21 = tpu.matmul %0, %20, %cst_19 {dimension_numbers = #tpu.dot_dimension_numbers<[1], [0], [0], [1], [0, 0, 1, 1], [], []>} : vector<8x32xf32>, vector<32x64xf32>, vector<8x64xf32> -> vector<8x64xf32>
    %c0_20 = arith.constant 0 : index
    %c0_21 = arith.constant 0 : index
    %22 = vector.load %arg8[%c0_20, %c0_21] : memref<1x64xf32, #tpu.memory_space<vmem>>, vector<1x64xf32>
    %23 = vector.broadcast %22 : vector<1x64xf32> to vector<8x64xf32>
    %24 = arith.addf %21, %23 : vector<8x64xf32>
    %c0_22 = arith.constant 0 : index
    %c0_23 = arith.constant 0 : index
    %25 = vector.load %arg9[%c0_22, %c0_23] : memref<1x64xf32, #tpu.memory_space<vmem>>, vector<1x64xf32>
    %c0_24 = arith.constant 0 : index
    %c0_25 = arith.constant 0 : index
    %26 = vector.load %arg10[%c0_24, %c0_25] : memref<1x64xf32, #tpu.memory_space<vmem>>, vector<1x64xf32>
    %cst_26 = arith.constant dense<0.000000e+00> : vector<8x8xf32>
    %27 = tpu.matmul %24, %2, %cst_26 {dimension_numbers = #tpu.dot_dimension_numbers<[1], [0], [0], [1], [0, 0, 1, 1], [], []>} : vector<8x64xf32>, vector<64x8xf32>, vector<8x8xf32> -> vector<8x8xf32>
    %cst_27 = arith.constant 1.250000e-01 : f32
    %28 = vector.broadcast %cst_27 : f32 to vector<8x8xf32>
    %29 = arith.mulf %27, %28 : vector<8x8xf32>
    %cst_28 = arith.constant dense<0.000000e+00> : vector<8x64xf32>
    %30 = tpu.matmul %29, %3, %cst_28 {dimension_numbers = #tpu.dot_dimension_numbers<[1], [0], [0], [1], [0, 0, 1, 1], [], []>} : vector<8x8xf32>, vector<8x64xf32>, vector<8x64xf32> -> vector<8x64xf32>
    %31 = arith.subf %24, %30 : vector<8x64xf32>
    %32 = arith.mulf %31, %31 : vector<8x64xf32>
    %cst_29 = arith.constant dense<0.000000e+00> : vector<8x8xf32>
    %33 = tpu.matmul %32, %2, %cst_29 {dimension_numbers = #tpu.dot_dimension_numbers<[1], [0], [0], [1], [0, 0, 1, 1], [], []>} : vector<8x64xf32>, vector<64x8xf32>, vector<8x8xf32> -> vector<8x8xf32>
    %cst_30 = arith.constant 1.250000e-01 : f32
    %34 = vector.broadcast %cst_30 : f32 to vector<8x8xf32>
    %35 = arith.mulf %33, %34 : vector<8x8xf32>
    %cst_31 = arith.constant 9.99999974E-6 : f32
    %36 = vector.broadcast %cst_31 : f32 to vector<8x8xf32>
    %37 = arith.addf %35, %36 : vector<8x8xf32>
    %38 = math.rsqrt %37 : vector<8x8xf32>
    %cst_32 = arith.constant dense<0.000000e+00> : vector<8x64xf32>
    %39 = tpu.matmul %38, %3, %cst_32 {dimension_numbers = #tpu.dot_dimension_numbers<[1], [0], [0], [1], [0, 0, 1, 1], [], []>} : vector<8x8xf32>, vector<8x64xf32>, vector<8x64xf32> -> vector<8x64xf32>
    %40 = arith.mulf %31, %39 : vector<8x64xf32>
    %41 = vector.broadcast %25 : vector<1x64xf32> to vector<8x64xf32>
    %42 = arith.mulf %40, %41 : vector<8x64xf32>
    %43 = vector.broadcast %26 : vector<1x64xf32> to vector<8x64xf32>
    %44 = arith.addf %42, %43 : vector<8x64xf32>
    %cst_33 = arith.constant 1.000000e+00 : f32
    %45 = vector.broadcast %cst_33 : f32 to vector<8x64xf32>
    %46 = arith.addf %14, %45 : vector<8x64xf32>
    %47 = arith.mulf %44, %46 : vector<8x64xf32>
    %48 = arith.addf %47, %19 : vector<8x64xf32>
    %49 = arith.negf %48 : vector<8x64xf32>
    %50 = math.exp %49 : vector<8x64xf32>
    %cst_34 = arith.constant 1.000000e+00 : f32
    %51 = vector.broadcast %cst_34 : f32 to vector<8x64xf32>
    %52 = arith.addf %51, %50 : vector<8x64xf32>
    %53 = arith.divf %51, %52 : vector<8x64xf32>
    %54 = arith.mulf %48, %53 : vector<8x64xf32>
    %c0_35 = arith.constant 0 : index
    %c0_36 = arith.constant 0 : index
    %55 = vector.load %arg11[%c0_35, %c0_36] : memref<64x64xf32, #tpu.memory_space<vmem>>, vector<64x64xf32>
    %cst_37 = arith.constant dense<0.000000e+00> : vector<8x64xf32>
    %56 = tpu.matmul %54, %55, %cst_37 {dimension_numbers = #tpu.dot_dimension_numbers<[1], [0], [0], [1], [0, 0, 1, 1], [], []>} : vector<8x64xf32>, vector<64x64xf32>, vector<8x64xf32> -> vector<8x64xf32>
    %c0_38 = arith.constant 0 : index
    %c0_39 = arith.constant 0 : index
    %57 = vector.load %arg12[%c0_38, %c0_39] : memref<1x64xf32, #tpu.memory_space<vmem>>, vector<1x64xf32>
    %58 = vector.broadcast %57 : vector<1x64xf32> to vector<8x64xf32>
    %59 = arith.addf %56, %58 : vector<8x64xf32>
    %c0_40 = arith.constant 0 : index
    %c0_41 = arith.constant 0 : index
    %60 = vector.load %arg13[%c0_40, %c0_41] : memref<1x64xf32, #tpu.memory_space<vmem>>, vector<1x64xf32>
    %c0_42 = arith.constant 0 : index
    %c0_43 = arith.constant 0 : index
    %61 = vector.load %arg14[%c0_42, %c0_43] : memref<1x64xf32, #tpu.memory_space<vmem>>, vector<1x64xf32>
    %cst_44 = arith.constant dense<0.000000e+00> : vector<8x8xf32>
    %62 = tpu.matmul %59, %2, %cst_44 {dimension_numbers = #tpu.dot_dimension_numbers<[1], [0], [0], [1], [0, 0, 1, 1], [], []>} : vector<8x64xf32>, vector<64x8xf32>, vector<8x8xf32> -> vector<8x8xf32>
    %cst_45 = arith.constant 1.250000e-01 : f32
    %63 = vector.broadcast %cst_45 : f32 to vector<8x8xf32>
    %64 = arith.mulf %62, %63 : vector<8x8xf32>
    %cst_46 = arith.constant dense<0.000000e+00> : vector<8x64xf32>
    %65 = tpu.matmul %64, %3, %cst_46 {dimension_numbers = #tpu.dot_dimension_numbers<[1], [0], [0], [1], [0, 0, 1, 1], [], []>} : vector<8x8xf32>, vector<8x64xf32>, vector<8x64xf32> -> vector<8x64xf32>
    %66 = arith.subf %59, %65 : vector<8x64xf32>
    %67 = arith.mulf %66, %66 : vector<8x64xf32>
    %cst_47 = arith.constant dense<0.000000e+00> : vector<8x8xf32>
    %68 = tpu.matmul %67, %2, %cst_47 {dimension_numbers = #tpu.dot_dimension_numbers<[1], [0], [0], [1], [0, 0, 1, 1], [], []>} : vector<8x64xf32>, vector<64x8xf32>, vector<8x8xf32> -> vector<8x8xf32>
    %cst_48 = arith.constant 1.250000e-01 : f32
    %69 = vector.broadcast %cst_48 : f32 to vector<8x8xf32>
    %70 = arith.mulf %68, %69 : vector<8x8xf32>
    %cst_49 = arith.constant 9.99999974E-6 : f32
    %71 = vector.broadcast %cst_49 : f32 to vector<8x8xf32>
    %72 = arith.addf %70, %71 : vector<8x8xf32>
    %73 = math.rsqrt %72 : vector<8x8xf32>
    %cst_50 = arith.constant dense<0.000000e+00> : vector<8x64xf32>
    %74 = tpu.matmul %73, %3, %cst_50 {dimension_numbers = #tpu.dot_dimension_numbers<[1], [0], [0], [1], [0, 0, 1, 1], [], []>} : vector<8x8xf32>, vector<8x64xf32>, vector<8x64xf32> -> vector<8x64xf32>
    %75 = arith.mulf %66, %74 : vector<8x64xf32>
    %76 = vector.broadcast %60 : vector<1x64xf32> to vector<8x64xf32>
    %77 = arith.mulf %75, %76 : vector<8x64xf32>
    %78 = vector.broadcast %61 : vector<1x64xf32> to vector<8x64xf32>
    %79 = arith.addf %77, %78 : vector<8x64xf32>
    %80 = arith.negf %79 : vector<8x64xf32>
    %81 = math.exp %80 : vector<8x64xf32>
    %cst_51 = arith.constant 1.000000e+00 : f32
    %82 = vector.broadcast %cst_51 : f32 to vector<8x64xf32>
    %83 = arith.addf %82, %81 : vector<8x64xf32>
    %84 = arith.divf %82, %83 : vector<8x64xf32>
    %85 = arith.mulf %79, %84 : vector<8x64xf32>
    %c0_52 = arith.constant 0 : index
    %c0_53 = arith.constant 0 : index
    %86 = vector.load %arg15[%c0_52, %c0_53] : memref<32x64xf32, #tpu.memory_space<vmem>>, vector<32x64xf32>
    %cst_54 = arith.constant dense<0.000000e+00> : vector<8x64xf32>
    %87 = tpu.matmul %0, %86, %cst_54 {dimension_numbers = #tpu.dot_dimension_numbers<[1], [0], [0], [1], [0, 0, 1, 1], [], []>} : vector<8x32xf32>, vector<32x64xf32>, vector<8x64xf32> -> vector<8x64xf32>
    %c0_55 = arith.constant 0 : index
    %c0_56 = arith.constant 0 : index
    %88 = vector.load %arg16[%c0_55, %c0_56] : memref<1x64xf32, #tpu.memory_space<vmem>>, vector<1x64xf32>
    %89 = vector.broadcast %88 : vector<1x64xf32> to vector<8x64xf32>
    %90 = arith.addf %87, %89 : vector<8x64xf32>
    %91 = arith.addf %85, %90 : vector<8x64xf32>
    %c0_57 = arith.constant 0 : index
    %c0_58 = arith.constant 0 : index
    %92 = vector.load %arg19[%c0_57, %c0_58] : memref<8x64xf32, #tpu.memory_space<vmem>>, vector<8x64xf32>
    tpu.vector_store %arg19[%c0_57, %c0_58], %91 {strides = array<i32>} : memref<8x64xf32, #tpu.memory_space<vmem>>, vector<8x64xf32>,
    return
  }
  func.func @transform_0(%arg0: i32) -> (i32, i32) {
    %c0_i32 = arith.constant 0 : i32
    %c0_i32_0 = arith.constant 0 : i32
    return %arg0, %c0_i32 : i32, i32
  }
  func.func @transform_1(%arg0: i32) -> (i32, i32) {
    %c0_i32 = arith.constant 0 : i32
    %c0_i32_0 = arith.constant 0 : i32
    return %arg0, %c0_i32 : i32, i32
  }
  func.func @transform_2(%arg0: i32) -> (i32, i32) {
    %c0_i32 = arith.constant 0 : i32
    %c0_i32_0 = arith.constant 0 : i32
    %c0_i32_1 = arith.constant 0 : i32
    return %c0_i32, %c0_i32_0 : i32, i32
  }
  func.func @transform_3(%arg0: i32) -> (i32, i32) {
    %c0_i32 = arith.constant 0 : i32
    %c0_i32_0 = arith.constant 0 : i32
    %c0_i32_1 = arith.constant 0 : i32
    return %c0_i32, %c0_i32_0 : i32, i32
  }
  func.func @transform_4(%arg0: i32) -> (i32, i32) {
    %c0_i32 = arith.constant 0 : i32
    %c0_i32_0 = arith.constant 0 : i32
    %c0_i32_1 = arith.constant 0 : i32
    return %c0_i32, %c0_i32_0 : i32, i32
  }
  func.func @transform_5(%arg0: i32) -> (i32, i32) {
    %c0_i32 = arith.constant 0 : i32
    %c0_i32_0 = arith.constant 0 : i32
    %c0_i32_1 = arith.constant 0 : i32
    return %c0_i32, %c0_i32_0 : i32, i32
  }
  func.func @transform_6(%arg0: i32) -> (i32, i32) {
    %c0_i32 = arith.constant 0 : i32
    %c0_i32_0 = arith.constant 0 : i32
    %c0_i32_1 = arith.constant 0 : i32
    return %c0_i32, %c0_i32_0 : i32, i32
  }
  func.func @transform_7(%arg0: i32) -> (i32, i32) {
    %c0_i32 = arith.constant 0 : i32
    %c0_i32_0 = arith.constant 0 : i32
    %c0_i32_1 = arith.constant 0 : i32
    return %c0_i32, %c0_i32_0 : i32, i32
  }
  func.func @transform_8(%arg0: i32) -> (i32, i32) {
    %c0_i32 = arith.constant 0 : i32
    %c0_i32_0 = arith.constant 0 : i32
    %c0_i32_1 = arith.constant 0 : i32
    return %c0_i32, %c0_i32_0 : i32, i32
  }
  func.func @transform_9(%arg0: i32) -> (i32, i32) {
    %c0_i32 = arith.constant 0 : i32
    %c0_i32_0 = arith.constant 0 : i32
    %c0_i32_1 = arith.constant 0 : i32
    return %c0_i32, %c0_i32_0 : i32, i32
  }
  func.func @transform_10(%arg0: i32) -> (i32, i32) {
    %c0_i32 = arith.constant 0 : i32
    %c0_i32_0 = arith.constant 0 : i32
    %c0_i32_1 = arith.constant 0 : i32
    return %c0_i32, %c0_i32_0 : i32, i32
  }
  func.func @transform_11(%arg0: i32) -> (i32, i32) {
    %c0_i32 = arith.constant 0 : i32
    %c0_i32_0 = arith.constant 0 : i32
    %c0_i32_1 = arith.constant 0 : i32
    return %c0_i32, %c0_i32_0 : i32, i32
  }
  func.func @transform_12(%arg0: i32) -> (i32, i32) {
    %c0_i32 = arith.constant 0 : i32
    %c0_i32_0 = arith.constant 0 : i32
    %c0_i32_1 = arith.constant 0 : i32
    return %c0_i32, %c0_i32_0 : i32, i32
  }
  func.func @transform_13(%arg0: i32) -> (i32, i32) {
    %c0_i32 = arith.constant 0 : i32
    %c0_i32_0 = arith.constant 0 : i32
    %c0_i32_1 = arith.constant 0 : i32
    return %c0_i32, %c0_i32_0 : i32, i32
  }
  func.func @transform_14(%arg0: i32) -> (i32, i32) {
    %c0_i32 = arith.constant 0 : i32
    %c0_i32_0 = arith.constant 0 : i32
    %c0_i32_1 = arith.constant 0 : i32
    return %c0_i32, %c0_i32_0 : i32, i32
  }
  func.func @transform_15(%arg0: i32) -> (i32, i32) {
    %c0_i32 = arith.constant 0 : i32
    %c0_i32_0 = arith.constant 0 : i32
    %c0_i32_1 = arith.constant 0 : i32
    return %c0_i32, %c0_i32_0 : i32, i32
  }
  func.func @transform_16(%arg0: i32) -> (i32, i32) {
    %c0_i32 = arith.constant 0 : i32
    %c0_i32_0 = arith.constant 0 : i32
    %c0_i32_1 = arith.constant 0 : i32
    return %c0_i32, %c0_i32_0 : i32, i32
  }
  func.func @transform_17(%arg0: i32) -> (i32, i32) {
    %c0_i32 = arith.constant 0 : i32
    %c0_i32_0 = arith.constant 0 : i32
    %c0_i32_1 = arith.constant 0 : i32
    return %c0_i32, %c0_i32_0 : i32, i32
  }
  func.func @transform_18(%arg0: i32) -> (i32, i32) {
    %c0_i32 = arith.constant 0 : i32
    %c0_i32_0 = arith.constant 0 : i32
    return %arg0, %c0_i32 : i32, i32
  }
}

</mosaic_0001>

<llo_original>
// kernel: tpu_custom_call.1
$region0: #{tpu_custom_call.1}
  #allocation0 [shape = 'u32[]', space=smem, size = 0x4, offset = 0x4, fixed_abs, tag = 'smem constant byte address 0x4 - core index']
  #allocation1 [shape = 'u32[144,128]{1,0:T(1,128)}', space=vmem, size = 0x12000, scoped, tag = 'internal scratch']
  %s0 = inlined_call_operand.hbm [shape: f32[16,32], index: 0, kind: input, shape index: {}]
  %s1 = inlined_call_operand.hbm [shape: f32[16,16], index: 1, kind: input, shape index: {}]
  %s2 = inlined_call_operand.hbm [shape: f32[16,64], index: 2, kind: input, shape index: {}]
  %s3 = inlined_call_operand.vmem [shape: f32[1,64], index: 3, kind: input, shape index: {}]
  %s4 = inlined_call_operand.hbm [shape: f32[16,64], index: 4, kind: input, shape index: {}]
  %s5 = inlined_call_operand.hbm [shape: f32[1,64], index: 5, kind: input, shape index: {}]
  %s6 = inlined_call_operand.hbm [shape: f32[32,64], index: 6, kind: input, shape index: {}]
  %s7 = inlined_call_operand.hbm [shape: f32[1,64], index: 7, kind: input, shape index: {}]
  %s8 = inlined_call_operand.hbm [shape: f32[1,64], index: 8, kind: input, shape index: {}]
  %s9 = inlined_call_operand.hbm [shape: f32[1,64], index: 9, kind: input, shape index: {}]
  %s10 = inlined_call_operand.vmem [shape: f32[64,64], index: 10, kind: input, shape index: {}]
  %s11 = inlined_call_operand.hbm [shape: f32[1,64], index: 11, kind: input, shape index: {}]
  %s12 = inlined_call_operand.hbm [shape: f32[1,64], index: 12, kind: input, shape index: {}]
  %s13 = inlined_call_operand.hbm [shape: f32[1,64], index: 13, kind: input, shape index: {}]
  %s14 = inlined_call_operand.vmem [shape: f32[32,64], index: 14, kind: input, shape index: {}]
  %s15 = inlined_call_operand.vmem [shape: f32[1,64], index: 15, kind: input, shape index: {}]
  %s16 = inlined_call_operand.vmem [shape: f32[64,8], index: 16, kind: input, shape index: {}]
  %s17 = inlined_call_operand.hbm [shape: f32[8,64], index: 17, kind: input, shape index: {}]
  %s18 = inlined_call_operand.hbm [shape: f32[16,64], index: 18, kind: output, shape index: {}]
  %s19 = sld [smem:[#allocation0]]
  $region157: #{tpu_custom_call.1} parent=0
    _
  %s21 = ssub.s32 1, %s19
  %s22 = scalar_select 0, %s21, %s19
  $region1: #{tpu_custom_call.1} parent=0
    #allocation2 [shape = 'u8[8192]{0}', space=vmem, size = 0x2000, scoped, tag = 'input window, operand 0']
    #allocation3 [shape = 's32[2]{0}', space=sflag, size = 0x8, scoped, tag = 'scoped memory for tpu_custom_call.1']
    #allocation4 [shape = 's32[2]{0}', space=sflag, size = 0x8, scoped, tag = 'scoped memory for tpu_custom_call.1']
    #allocation5 [shape = 'u8[8192]{0}', space=vmem, size = 0x2000, scoped, tag = 'input window, operand 1']
    #allocation6 [shape = 's32[2]{0}', space=sflag, size = 0x8, scoped, tag = 'scoped memory for tpu_custom_call.1']
    #allocation7 [shape = 'u8[8192]{0}', space=vmem, size = 0x2000, scoped, tag = 'input window, operand 2, single buffered']
    #allocation8 [shape = 'u8[8192]{0}', space=vmem, size = 0x2000, scoped, tag = 'input window, operand 4, single buffered']
    #allocation9 [shape = 's32[1]{0}', space=sflag, size = 0x4, scoped, tag = 'scoped memory for tpu_custom_call.1']
    #allocation10 [shape = 'u8[512]{0}', space=vmem, size = 0x400, scoped, tag = 'input window, operand 5, single buffered']
    #allocation11 [shape = 'u8[16384]{0}', space=vmem, size = 0x4000, scoped, tag = 'input window, operand 6, single buffered']
    #allocation12 [shape = 's32[1]{0}', space=sflag, size = 0x4, scoped, tag = 'scoped memory for tpu_custom_call.1']
    #allocation13 [shape = 'u8[512]{0}', space=vmem, size = 0x400, scoped, tag = 'input window, operand 7, single buffered']
    #allocation14 [shape = 'u8[512]{0}', space=vmem, size = 0x400, scoped, tag = 'input window, operand 8, single buffered']
    #allocation15 [shape = 's32[1]{0}', space=sflag, size = 0x4, scoped, tag = 'scoped memory for tpu_custom_call.1']
    #allocation16 [shape = 'u8[512]{0}', space=vmem, size = 0x400, scoped, tag = 'input window, operand 9, single buffered']
    #allocation17 [shape = 'u8[512]{0}', space=vmem, size = 0x400, scoped, tag = 'input window, operand 11, single buffered']
    #allocation18 [shape = 's32[1]{0}', space=sflag, size = 0x4, scoped, tag = 'scoped memory for tpu_custom_call.1']
    #allocation19 [shape = 'u8[512]{0}', space=vmem, size = 0x400, scoped, tag = 'input window, operand 12, single buffered']
    #allocation20 [shape = 'u8[512]{0}', space=vmem, size = 0x400, scoped, tag = 'input window, operand 13, single buffered']
    #allocation21 [shape = 's32[1]{0}', space=sflag, size = 0x4, scoped, tag = 'scoped memory for tpu_custom_call.1']
    #allocation22 [shape = 'u8[4096]{0}', space=vmem, size = 0x1000, scoped, tag = 'input window, operand 17, single buffered']
    #allocation23 [shape = 'u8[8192]{0}', space=vmem, size = 0x2000, scoped, tag = 'output window, operand 0']
    %23 = vsyncpa [#allocation3], 0
    %s24 = scalar_lea.sflag [#allocation3], 1
    %25 = vsyncpa %s24, 0
    %26 = vsyncpa [#allocation6], 0
    %s27 = scalar_lea.sflag [#allocation6], 1
    %28 = vsyncpa %s27, 0
    %29 = vsyncpa [#allocation9], 0
    %30 = vsyncpa [#allocation12], 0
    %31 = vsyncpa [#allocation15], 0
    %32 = vsyncpa [#allocation18], 0
    %33 = vsyncpa [#allocation21], 0
    %34 = vsyncpa [#allocation4], 0
    %s35 = scalar_lea.sflag [#allocation4], 1
    %36 = vsyncpa %s35, 0
    loop: start=0, step=1, limit=4
    $region2: #{tpu_custom_call.1} parent=1 // loop_pre_header
      _
    $region3: #{tpu_custom_call.1} parent=1 // loop_header
      %s38 = sphi 0, %s42
      %p39 = scmp.ge.s32.totalorder %s38, 4
      %s48 = sphi 0, %s50
      %s51 = sphi 0, %s48
      %s52 = sphi 0, %s51
      %s68 = sphi 0, %s52
      %s74 = sphi 0, %s76
      %s77 = sphi 0, %s74
      %s78 = sphi 0, %s77
      %s94 = sphi 0, %s78
      %s98 = sphi 0, %s98
      %s100 = sphi 0, %s98
      %s101 = sphi 0, %s100
      %s115 = sphi 0, %s101
      %s119 = sphi 0, %s119
      %s121 = sphi 0, %s119
      %s122 = sphi 0, %s121
      %s136 = sphi 0, %s122
      %s140 = sphi 0, %s140
      %s142 = sphi 0, %s140
      %s143 = sphi 0, %s142
      %s157 = sphi 0, %s143
      %s161 = sphi 0, %s161
      %s163 = sphi 0, %s161
      %s164 = sphi 0, %s163
      %s178 = sphi 0, %s164
      %s182 = sphi 0, %s182
      %s184 = sphi 0, %s182
      %s185 = sphi 0, %s184
      %s199 = sphi 0, %s185
      %s203 = sphi 0, %s203
      %s205 = sphi 0, %s203
      %s206 = sphi 0, %s205
      %s220 = sphi 0, %s206
      %s224 = sphi 0, %s224
      %s226 = sphi 0, %s224
      %s227 = sphi 0, %s226
      %s241 = sphi 0, %s227
      %s245 = sphi 0, %s245
      %s247 = sphi 0, %s245
      %s248 = sphi 0, %s247
      %s262 = sphi 0, %s248
      %s266 = sphi 0, %s266
      %s268 = sphi 0, %s266
      %s269 = sphi 0, %s268
      %s283 = sphi 0, %s269
      %s287 = sphi 0, %s287
      %s289 = sphi 0, %s287
      %s290 = sphi 0, %s289
      %s304 = sphi 0, %s290
      %s308 = sphi 0, %s308
      %s310 = sphi 0, %s308
      %s311 = sphi 0, %s310
      %s325 = sphi 0, %s311
      %s329 = sphi 0, %s329
      %s331 = sphi 0, %s329
      %s332 = sphi 0, %s331
      %s346 = sphi 0, %s332
      %s350 = sphi 0, %s350
      %s352 = sphi 0, %s350
      %s353 = sphi 0, %s352
      %s367 = sphi 0, %s353
      %s371 = sphi 0, %s371
      %s373 = sphi 0, %s371
      %s374 = sphi 0, %s373
      %s388 = sphi 0, %s374
      %s392 = sphi 0, %s392
      %s394 = sphi 0, %s392
      %s395 = sphi 0, %s394
      %s409 = sphi 0, %s395
      %s413 = sphi 0, %s413
      %s415 = sphi 0, %s413
      %s416 = sphi 0, %s415
      %s430 = sphi 0, %s416
      %s436 = sphi 0, %s438
      %s439 = sphi 0, %s436
      %s440 = sphi 0, %s439
      %s456 = sphi 0, %s440
    $region4: #{tpu_custom_call.1} parent=1 // loop_header_branch
      %41 = sbr.rel (%p39) target = $region8
    $region5: #{tpu_custom_call.1} parent=1 // loop_body
      %s43 = ssub.s32 %s38, 1
      %s44 = ssub.s32 %s38, 2
      %s45 = sadd.s32 %s38, 1
      %s46 = ssub.s32 %s38, %s45
      %p47 = scmp.eq.s32.totalorder %s46, 0
      %s49 = sadd.s32 %s48, 1
      %s50 = scalar_select %p47, %s48, %s49
      %p53 = pneg %p47
      %p54 = scmp.eq.s32.totalorder %s38, 1
      %p55 = por %p53, %p54
      %p56 = scmp.ne.s32.totalorder %s48, %s51
      %p57 = scmp.eq.s32.totalorder %s38, 0
      %p58 = por %p56, %p57
      %p59 = scmp.ne.s32.totalorder %s48, %s51
      %p60 = scmp.eq.s32.totalorder %s43, 1
      %p61 = por %p59, %p60
      %p62 = scmp.ne.s32.totalorder %s51, %s52
      %p63 = scmp.eq.s32.totalorder %s43, 0
      %p64 = por %p62, %p63
      %p65 = scmp.ne.s32.totalorder %s51, %s52
      %p66 = scmp.eq.s32.totalorder %s44, 1
      %p67 = por %p65, %p66
      %p69 = scmp.ne.s32.totalorder %s52, %s68
      %p70 = scmp.eq.s32.totalorder %s44, 0
      %p71 = por %p69, %p70
      %s72 = ssub.s32 %s38, %s45
      %p73 = scmp.eq.s32.totalorder %s72, 0
      %s75 = sadd.s32 %s74, 1
      %s76 = scalar_select %p73, %s74, %s75
      %p79 = pneg %p73
      %p80 = scmp.eq.s32.totalorder %s38, 1
      %p81 = por %p79, %p80
      %p82 = scmp.ne.s32.totalorder %s74, %s77
      %p83 = scmp.eq.s32.totalorder %s38, 0
      %p84 = por %p82, %p83
      %p85 = scmp.ne.s32.totalorder %s74, %s77
      %p86 = scmp.eq.s32.totalorder %s43, 1
      %p87 = por %p85, %p86
      %p88 = scmp.ne.s32.totalorder %s77, %s78
      %p89 = scmp.eq.s32.totalorder %s43, 0
      %p90 = por %p88, %p89
      %p91 = scmp.ne.s32.totalorder %s77, %s78
      %p92 = scmp.eq.s32.totalorder %s44, 1
      %p93 = por %p91, %p92
      %p95 = scmp.ne.s32.totalorder %s78, %s94
      %p96 = scmp.eq.s32.totalorder %s44, 0
      %p97 = por %p95, %p96
      %s99 = sadd.s32 %s98, 1
      %p102 = scmp.eq.s32.totalorder %s38, 1
      %p103 = scmp.ne.s32.totalorder %s98, %s100
      %p104 = scmp.eq.s32.totalorder %s38, 0
      %p105 = por %p103, %p104
      %p106 = scmp.ne.s32.totalorder %s98, %s100
      %p107 = scmp.eq.s32.totalorder %s43, 1
      %p108 = por %p106, %p107
      %p109 = scmp.ne.s32.totalorder %s100, %s101
      %p110 = scmp.eq.s32.totalorder %s43, 0
      %p111 = por %p109, %p110
      %p112 = scmp.ne.s32.totalorder %s100, %s101
      %p113 = scmp.eq.s32.totalorder %s44, 1
      %p114 = por %p112, %p113
      %p116 = scmp.ne.s32.totalorder %s101, %s115
      %p117 = scmp.eq.s32.totalorder %s44, 0
      %p118 = por %p116, %p117
      %s120 = sadd.s32 %s119, 1
      %p123 = scmp.eq.s32.totalorder %s38, 1
      %p124 = scmp.ne.s32.totalorder %s119, %s121
      %p125 = scmp.eq.s32.totalorder %s38, 0
      %p126 = por %p124, %p125
      %p127 = scmp.ne.s32.totalorder %s119, %s121
      %p128 = scmp.eq.s32.totalorder %s43, 1
      %p129 = por %p127, %p128
      %p130 = scmp.ne.s32.totalorder %s121, %s122
      %p131 = scmp.eq.s32.totalorder %s43, 0
      %p132 = por %p130, %p131
      %p133 = scmp.ne.s32.totalorder %s121, %s122
      %p134 = scmp.eq.s32.totalorder %s44, 1
      %p135 = por %p133, %p134
      %p137 = scmp.ne.s32.totalorder %s122, %s136
      %p138 = scmp.eq.s32.totalorder %s44, 0
      %p139 = por %p137, %p138
      %s141 = sadd.s32 %s140, 1
      %p144 = scmp.eq.s32.totalorder %s38, 1
      %p145 = scmp.ne.s32.totalorder %s140, %s142
      %p146 = scmp.eq.s32.totalorder %s38, 0
      %p147 = por %p145, %p146
      %p148 = scmp.ne.s32.totalorder %s140, %s142
      %p149 = scmp.eq.s32.totalorder %s43, 1
      %p150 = por %p148, %p149
      %p151 = scmp.ne.s32.totalorder %s142, %s143
      %p152 = scmp.eq.s32.totalorder %s43, 0
      %p153 = por %p151, %p152
      %p154 = scmp.ne.s32.totalorder %s142, %s143
      %p155 = scmp.eq.s32.totalorder %s44, 1
      %p156 = por %p154, %p155
      %p158 = scmp.ne.s32.totalorder %s143, %s157
      %p159 = scmp.eq.s32.totalorder %s44, 0
      %p160 = por %p158, %p159
      %s162 = sadd.s32 %s161, 1
      %p165 = scmp.eq.s32.totalorder %s38, 1
      %p166 = scmp.ne.s32.totalorder %s161, %s163
      %p167 = scmp.eq.s32.totalorder %s38, 0
      %p168 = por %p166, %p167
      %p169 = scmp.ne.s32.totalorder %s161, %s163
      %p170 = scmp.eq.s32.totalorder %s43, 1
      %p171 = por %p169, %p170
      %p172 = scmp.ne.s32.totalorder %s163, %s164
      %p173 = scmp.eq.s32.totalorder %s43, 0
      %p174 = por %p172, %p173
      %p175 = scmp.ne.s32.totalorder %s163, %s164
      %p176 = scmp.eq.s32.totalorder %s44, 1
      %p177 = por %p175, %p176
      %p179 = scmp.ne.s32.totalorder %s164, %s178
      %p180 = scmp.eq.s32.totalorder %s44, 0
      %p181 = por %p179, %p180
      %s183 = sadd.s32 %s182, 1
      %p186 = scmp.eq.s32.totalorder %s38, 1
      %p187 = scmp.ne.s32.totalorder %s182, %s184
      %p188 = scmp.eq.s32.totalorder %s38, 0
      %p189 = por %p187, %p188
      %p190 = scmp.ne.s32.totalorder %s182, %s184
      %p191 = scmp.eq.s32.totalorder %s43, 1
      %p192 = por %p190, %p191
      %p193 = scmp.ne.s32.totalorder %s184, %s185
      %p194 = scmp.eq.s32.totalorder %s43, 0
      %p195 = por %p193, %p194
      %p196 = scmp.ne.s32.totalorder %s184, %s185
      %p197 = scmp.eq.s32.totalorder %s44, 1
      %p198 = por %p196, %p197
      %p200 = scmp.ne.s32.totalorder %s185, %s199
      %p201 = scmp.eq.s32.totalorder %s44, 0
      %p202 = por %p200, %p201
      %s204 = sadd.s32 %s203, 1
      %p207 = scmp.eq.s32.totalorder %s38, 1
      %p208 = scmp.ne.s32.totalorder %s203, %s205
      %p209 = scmp.eq.s32.totalorder %s38, 0
      %p210 = por %p208, %p209
      %p211 = scmp.ne.s32.totalorder %s203, %s205
      %p212 = scmp.eq.s32.totalorder %s43, 1
      %p213 = por %p211, %p212
      %p214 = scmp.ne.s32.totalorder %s205, %s206
      %p215 = scmp.eq.s32.totalorder %s43, 0
      %p216 = por %p214, %p215
      %p217 = scmp.ne.s32.totalorder %s205, %s206
      %p218 = scmp.eq.s32.totalorder %s44, 1
      %p219 = por %p217, %p218
      %p221 = scmp.ne.s32.totalorder %s206, %s220
      %p222 = scmp.eq.s32.totalorder %s44, 0
      %p223 = por %p221, %p222
      %s225 = sadd.s32 %s224, 1
      %p228 = scmp.eq.s32.totalorder %s38, 1
      %p229 = scmp.ne.s32.totalorder %s224, %s226
      %p230 = scmp.eq.s32.totalorder %s38, 0
      %p231 = por %p229, %p230
      %p232 = scmp.ne.s32.totalorder %s224, %s226
      %p233 = scmp.eq.s32.totalorder %s43, 1
      %p234 = por %p232, %p233
      %p235 = scmp.ne.s32.totalorder %s226, %s227
      %p236 = scmp.eq.s32.totalorder %s43, 0
      %p237 = por %p235, %p236
      %p238 = scmp.ne.s32.totalorder %s226, %s227
      %p239 = scmp.eq.s32.totalorder %s44, 1
      %p240 = por %p238, %p239
      %p242 = scmp.ne.s32.totalorder %s227, %s241
      %p243 = scmp.eq.s32.totalorder %s44, 0
      %p244 = por %p242, %p243
      %s246 = sadd.s32 %s245, 1
      %p249 = scmp.eq.s32.totalorder %s38, 1
      %p250 = scmp.ne.s32.totalorder %s245, %s247
      %p251 = scmp.eq.s32.totalorder %s38, 0
      %p252 = por %p250, %p251
      %p253 = scmp.ne.s32.totalorder %s245, %s247
      %p254 = scmp.eq.s32.totalorder %s43, 1
      %p255 = por %p253, %p254
      %p256 = scmp.ne.s32.totalorder %s247, %s248
      %p257 = scmp.eq.s32.totalorder %s43, 0
      %p258 = por %p256, %p257
      %p259 = scmp.ne.s32.totalorder %s247, %s248
      %p260 = scmp.eq.s32.totalorder %s44, 1
      %p261 = por %p259, %p260
      %p263 = scmp.ne.s32.totalorder %s248, %s262
      %p264 = scmp.eq.s32.totalorder %s44, 0
      %p265 = por %p263, %p264
      %s267 = sadd.s32 %s266, 1
      %p270 = scmp.eq.s32.totalorder %s38, 1
      %p271 = scmp.ne.s32.totalorder %s266, %s268
      %p272 = scmp.eq.s32.totalorder %s38, 0
      %p273 = por %p271, %p272
      %p274 = scmp.ne.s32.totalorder %s266, %s268
      %p275 = scmp.eq.s32.totalorder %s43, 1
      %p276 = por %p274, %p275
      %p277 = scmp.ne.s32.totalorder %s268, %s269
      %p278 = scmp.eq.s32.totalorder %s43, 0
      %p279 = por %p277, %p278
      %p280 = scmp.ne.s32.totalorder %s268, %s269
      %p281 = scmp.eq.s32.totalorder %s44, 1
      %p282 = por %p280, %p281
      %p284 = scmp.ne.s32.totalorder %s269, %s283
      %p285 = scmp.eq.s32.totalorder %s44, 0
      %p286 = por %p284, %p285
      %s288 = sadd.s32 %s287, 1
      %p291 = scmp.eq.s32.totalorder %s38, 1
      %p292 = scmp.ne.s32.totalorder %s287, %s289
      %p293 = scmp.eq.s32.totalorder %s38, 0
      %p294 = por %p292, %p293
      %p295 = scmp.ne.s32.totalorder %s287, %s289
      %p296 = scmp.eq.s32.totalorder %s43, 1
      %p297 = por %p295, %p296
      %p298 = scmp.ne.s32.totalorder %s289, %s290
      %p299 = scmp.eq.s32.totalorder %s43, 0
      %p300 = por %p298, %p299
      %p301 = scmp.ne.s32.totalorder %s289, %s290
      %p302 = scmp.eq.s32.totalorder %s44, 1
      %p303 = por %p301, %p302
      %p305 = scmp.ne.s32.totalorder %s290, %s304
      %p306 = scmp.eq.s32.totalorder %s44, 0
      %p307 = por %p305, %p306
      %s309 = sadd.s32 %s308, 1
      %p312 = scmp.eq.s32.totalorder %s38, 1
      %p313 = scmp.ne.s32.totalorder %s308, %s310
      %p314 = scmp.eq.s32.totalorder %s38, 0
      %p315 = por %p313, %p314
      %p316 = scmp.ne.s32.totalorder %s308, %s310
      %p317 = scmp.eq.s32.totalorder %s43, 1
      %p318 = por %p316, %p317
      %p319 = scmp.ne.s32.totalorder %s310, %s311
      %p320 = scmp.eq.s32.totalorder %s43, 0
      %p321 = por %p319, %p320
      %p322 = scmp.ne.s32.totalorder %s310, %s311
      %p323 = scmp.eq.s32.totalorder %s44, 1
      %p324 = por %p322, %p323
      %p326 = scmp.ne.s32.totalorder %s311, %s325
      %p327 = scmp.eq.s32.totalorder %s44, 0
      %p328 = por %p326, %p327
      %s330 = sadd.s32 %s329, 1
      %p333 = scmp.eq.s32.totalorder %s38, 1
      %p334 = scmp.ne.s32.totalorder %s329, %s331
      %p335 = scmp.eq.s32.totalorder %s38, 0
      %p336 = por %p334, %p335
      %p337 = scmp.ne.s32.totalorder %s329, %s331
      %p338 = scmp.eq.s32.totalorder %s43, 1
      %p339 = por %p337, %p338
      %p340 = scmp.ne.s32.totalorder %s331, %s332
      %p341 = scmp.eq.s32.totalorder %s43, 0
      %p342 = por %p340, %p341
      %p343 = scmp.ne.s32.totalorder %s331, %s332
      %p344 = scmp.eq.s32.totalorder %s44, 1
      %p345 = por %p343, %p344
      %p347 = scmp.ne.s32.totalorder %s332, %s346
      %p348 = scmp.eq.s32.totalorder %s44, 0
      %p349 = por %p347, %p348
      %s351 = sadd.s32 %s350, 1
      %p354 = scmp.eq.s32.totalorder %s38, 1
      %p355 = scmp.ne.s32.totalorder %s350, %s352
      %p356 = scmp.eq.s32.totalorder %s38, 0
      %p357 = por %p355, %p356
      %p358 = scmp.ne.s32.totalorder %s350, %s352
      %p359 = scmp.eq.s32.totalorder %s43, 1
      %p360 = por %p358, %p359
      %p361 = scmp.ne.s32.totalorder %s352, %s353
      %p362 = scmp.eq.s32.totalorder %s43, 0
      %p363 = por %p361, %p362
      %p364 = scmp.ne.s32.totalorder %s352, %s353
      %p365 = scmp.eq.s32.totalorder %s44, 1
      %p366 = por %p364, %p365
      %p368 = scmp.ne.s32.totalorder %s353, %s367
      %p369 = scmp.eq.s32.totalorder %s44, 0
      %p370 = por %p368, %p369
      %s372 = sadd.s32 %s371, 1
      %p375 = scmp.eq.s32.totalorder %s38, 1
      %p376 = scmp.ne.s32.totalorder %s371, %s373
      %p377 = scmp.eq.s32.totalorder %s38, 0
      %p378 = por %p376, %p377
      %p379 = scmp.ne.s32.totalorder %s371, %s373
      %p380 = scmp.eq.s32.totalorder %s43, 1
      %p381 = por %p379, %p380
      %p382 = scmp.ne.s32.totalorder %s373, %s374
      %p383 = scmp.eq.s32.totalorder %s43, 0
      %p384 = por %p382, %p383
      %p385 = scmp.ne.s32.totalorder %s373, %s374
      %p386 = scmp.eq.s32.totalorder %s44, 1
      %p387 = por %p385, %p386
      %p389 = scmp.ne.s32.totalorder %s374, %s388
      %p390 = scmp.eq.s32.totalorder %s44, 0
      %p391 = por %p389, %p390
      %s393 = sadd.s32 %s392, 1
      %p396 = scmp.eq.s32.totalorder %s38, 1
      %p397 = scmp.ne.s32.totalorder %s392, %s394
      %p398 = scmp.eq.s32.totalorder %s38, 0
      %p399 = por %p397, %p398
      %p400 = scmp.ne.s32.totalorder %s392, %s394
      %p401 = scmp.eq.s32.totalorder %s43, 1
      %p402 = por %p400, %p401
      %p403 = scmp.ne.s32.totalorder %s394, %s395
      %p404 = scmp.eq.s32.totalorder %s43, 0
      %p405 = por %p403, %p404
      %p406 = scmp.ne.s32.totalorder %s394, %s395
      %p407 = scmp.eq.s32.totalorder %s44, 1
      %p408 = por %p406, %p407
      %p410 = scmp.ne.s32.totalorder %s395, %s409
      %p411 = scmp.eq.s32.totalorder %s44, 0
      %p412 = por %p410, %p411
      %s414 = sadd.s32 %s413, 1
      %p417 = scmp.eq.s32.totalorder %s38, 1
      %p418 = scmp.ne.s32.totalorder %s413, %s415
      %p419 = scmp.eq.s32.totalorder %s38, 0
      %p420 = por %p418, %p419
      %p421 = scmp.ne.s32.totalorder %s413, %s415
      %p422 = scmp.eq.s32.totalorder %s43, 1
      %p423 = por %p421, %p422
      %p424 = scmp.ne.s32.totalorder %s415, %s416
      %p425 = scmp.eq.s32.totalorder %s43, 0
      %p426 = por %p424, %p425
      %p427 = scmp.ne.s32.totalorder %s415, %s416
      %p428 = scmp.eq.s32.totalorder %s44, 1
      %p429 = por %p427, %p428
      %p431 = scmp.ne.s32.totalorder %s416, %s430
      %p432 = scmp.eq.s32.totalorder %s44, 0
      %p433 = por %p431, %p432
      %s434 = ssub.s32 %s38, %s45
      %p435 = scmp.eq.s32.totalorder %s434, 0
      %s437 = sadd.s32 %s436, 1
      %s438 = scalar_select %p435, %s436, %s437
      %p441 = pneg %p435
      %p442 = scmp.eq.s32.totalorder %s38, 1
      %p443 = por %p441, %p442
      %p444 = scmp.ne.s32.totalorder %s436, %s439
      %p445 = scmp.eq.s32.totalorder %s38, 0
      %p446 = por %p444, %p445
      %p447 = scmp.ne.s32.totalorder %s436, %s439
      %p448 = scmp.eq.s32.totalorder %s43, 1
      %p449 = por %p447, %p448
      %p450 = scmp.ne.s32.totalorder %s439, %s440
      %p451 = scmp.eq.s32.totalorder %s43, 0
      %p452 = por %p450, %p451
      %p453 = scmp.ne.s32.totalorder %s439, %s440
      %p454 = scmp.eq.s32.totalorder %s44, 1
      %p455 = por %p453, %p454
      %p457 = scmp.ne.s32.totalorder %s440, %s456
      %p458 = scmp.eq.s32.totalorder %s44, 0
      %p459 = por %p457, %p458
      %p460 = scmp.le.s32.totalorder 1, %s38
      %p461 = scmp.lt.s32.totalorder %s38, 3
      %p462 = pnand %p460, %p461
      %p463 = pneg %p462
      // Predicated region
      $region9: #{tpu_custom_call.1} parent=5 // pred_check
        _
      $region10: #{tpu_custom_call.1} parent=5 // pred_check_branch
        %465 = sbr.rel (%p462) target = $region12
      $region11: #{tpu_custom_call.1} parent=5 // pred_region
        %s466 = ssub.s32 %s38, 1
        // Predicated region
        $region13: #{tpu_custom_call.1} parent=11 // pred_check
          %p467 = pneg %p111
        $region14: #{tpu_custom_call.1} parent=11 // pred_check_branch
          %469 = sbr.rel (%p467) target = $region16
        $region15: #{tpu_custom_call.1} parent=11 // pred_region
          %s471 = ssub.s32 256, 256
          %472 = vsyncadd [#allocation6], %s471
          %s473 = sshll.u32 [#allocation7], 4
          %s474 = int_to_ptr.vmem [resolvable:$true] %s473
          %479 = dma.hbm_to_vmem [thread:$0]  %s2, 256, %s474, [#allocation6], 128, 128, 8
        $region16: #{tpu_custom_call.1} parent=11 // pred_fallthru
          _
        // Predicated region
        $region17: #{tpu_custom_call.1} parent=11 // pred_check
          %p480 = pneg %p132
        $region18: #{tpu_custom_call.1} parent=11 // pred_check_branch
          %482 = sbr.rel (%p480) target = $region20
        $region19: #{tpu_custom_call.1} parent=11 // pred_region
          _
        $region20: #{tpu_custom_call.1} parent=11 // pred_fallthru
          _
        // Predicated region
        $region21: #{tpu_custom_call.1} parent=11 // pred_check
          %p483 = pneg %p153
        $region22: #{tpu_custom_call.1} parent=11 // pred_check_branch
          %485 = sbr.rel (%p483) target = $region24
        $region23: #{tpu_custom_call.1} parent=11 // pred_region
          %s487 = ssub.s32 256, 256
          %488 = vsyncadd [#allocation9], %s487
          %s489 = sshll.u32 [#allocation8], 4
          %s490 = int_to_ptr.vmem [resolvable:$true] %s489
          %495 = dma.hbm_to_vmem [thread:$0]  %s4, 256, %s490, [#allocation9], 128, 128, 8
        $region24: #{tpu_custom_call.1} parent=11 // pred_fallthru
          _
        // Predicated region
        $region25: #{tpu_custom_call.1} parent=11 // pred_check
          %p496 = pneg %p174
        $region26: #{tpu_custom_call.1} parent=11 // pred_check_branch
          %498 = sbr.rel (%p496) target = $region28
        $region27: #{tpu_custom_call.1} parent=11 // pred_region
          %s500 = ssub.s32 16, 16
          %501 = vsyncadd [#allocation9], %s500
          %s503 = sshll.u32 [#allocation10], 4
          %s504 = int_to_ptr.vmem [resolvable:$true] %s503
          %506 = dma.hbm_to_vmem [thread:$0]  %s5, 16, %s504, [#allocation9]
        $region28: #{tpu_custom_call.1} parent=11 // pred_fallthru
          _
        // Predicated region
        $region29: #{tpu_custom_call.1} parent=11 // pred_check
          %p507 = pneg %p195
        $region30: #{tpu_custom_call.1} parent=11 // pred_check_branch
          %509 = sbr.rel (%p507) target = $region32
        $region31: #{tpu_custom_call.1} parent=11 // pred_region
          %s511 = ssub.s32 512, 512
          %512 = vsyncadd [#allocation12], %s511
          %s513 = sshll.u32 [#allocation11], 4
          %s514 = int_to_ptr.vmem [resolvable:$true] %s513
          %519 = dma.hbm_to_vmem [thread:$0]  %s6, 512, %s514, [#allocation12], 128, 128, 8
        $region32: #{tpu_custom_call.1} parent=11 // pred_fallthru
          _
        // Predicated region
        $region33: #{tpu_custom_call.1} parent=11 // pred_check
          %p520 = pneg %p216
        $region34: #{tpu_custom_call.1} parent=11 // pred_check_branch
          %522 = sbr.rel (%p520) target = $region36
        $region35: #{tpu_custom_call.1} parent=11 // pred_region
          %s524 = ssub.s32 16, 16
          %525 = vsyncadd [#allocation12], %s524
          %s527 = sshll.u32 [#allocation13], 4
          %s528 = int_to_ptr.vmem [resolvable:$true] %s527
          %530 = dma.hbm_to_vmem [thread:$0]  %s7, 16, %s528, [#allocation12]
        $region36: #{tpu_custom_call.1} parent=11 // pred_fallthru
          _
        // Predicated region
        $region37: #{tpu_custom_call.1} parent=11 // pred_check
          %p531 = pneg %p237
        $region38: #{tpu_custom_call.1} parent=11 // pred_check_branch
          %533 = sbr.rel (%p531) target = $region40
        $region39: #{tpu_custom_call.1} parent=11 // pred_region
          %s535 = ssub.s32 16, 16
          %536 = vsyncadd [#allocation15], %s535
          %s538 = sshll.u32 [#allocation14], 4
          %s539 = int_to_ptr.vmem [resolvable:$true] %s538
          %541 = dma.hbm_to_vmem [thread:$0]  %s8, 16, %s539, [#allocation15]
        $region40: #{tpu_custom_call.1} parent=11 // pred_fallthru
          _
        // Predicated region
        $region41: #{tpu_custom_call.1} parent=11 // pred_check
          %p542 = pneg %p258
        $region42: #{tpu_custom_call.1} parent=11 // pred_check_branch
          %544 = sbr.rel (%p542) target = $region44
        $region43: #{tpu_custom_call.1} parent=11 // pred_region
          %s546 = ssub.s32 16, 16
          %547 = vsyncadd [#allocation15], %s546
          %s549 = sshll.u32 [#allocation16], 4
          %s550 = int_to_ptr.vmem [resolvable:$true] %s549
          %552 = dma.hbm_to_vmem [thread:$0]  %s9, 16, %s550, [#allocation15]
        $region44: #{tpu_custom_call.1} parent=11 // pred_fallthru
          _
        // Predicated region
        $region45: #{tpu_custom_call.1} parent=11 // pred_check
          %p553 = pneg %p279
        $region46: #{tpu_custom_call.1} parent=11 // pred_check_branch
          %555 = sbr.rel (%p553) target = $region48
        $region47: #{tpu_custom_call.1} parent=11 // pred_region
          _
        $region48: #{tpu_custom_call.1} parent=11 // pred_fallthru
          _
        // Predicated region
        $region49: #{tpu_custom_call.1} parent=11 // pred_check
          %p556 = pneg %p300
        $region50: #{tpu_custom_call.1} parent=11 // pred_check_branch
          %558 = sbr.rel (%p556) target = $region52
        $region51: #{tpu_custom_call.1} parent=11 // pred_region
          %s560 = ssub.s32 16, 16
          %561 = vsyncadd [#allocation18], %s560
          %s563 = sshll.u32 [#allocation17], 4
          %s564 = int_to_ptr.vmem [resolvable:$true] %s563
          %566 = dma.hbm_to_vmem [thread:$0]  %s11, 16, %s564, [#allocation18]
        $region52: #{tpu_custom_call.1} parent=11 // pred_fallthru
          _
        // Predicated region
        $region53: #{tpu_custom_call.1} parent=11 // pred_check
          %p567 = pneg %p321
        $region54: #{tpu_custom_call.1} parent=11 // pred_check_branch
          %569 = sbr.rel (%p567) target = $region56
        $region55: #{tpu_custom_call.1} parent=11 // pred_region
          %s571 = ssub.s32 16, 16
          %572 = vsyncadd [#allocation18], %s571
          %s574 = sshll.u32 [#allocation19], 4
          %s575 = int_to_ptr.vmem [resolvable:$true] %s574
          %577 = dma.hbm_to_vmem [thread:$0]  %s12, 16, %s575, [#allocation18]
        $region56: #{tpu_custom_call.1} parent=11 // pred_fallthru
          _
        // Predicated region
        $region57: #{tpu_custom_call.1} parent=11 // pred_check
          %p578 = pneg %p342
        $region58: #{tpu_custom_call.1} parent=11 // pred_check_branch
          %580 = sbr.rel (%p578) target = $region60
        $region59: #{tpu_custom_call.1} parent=11 // pred_region
          %s582 = ssub.s32 16, 16
          %583 = vsyncadd [#allocation21], %s582
          %s585 = sshll.u32 [#allocation20], 4
          %s586 = int_to_ptr.vmem [resolvable:$true] %s585
          %588 = dma.hbm_to_vmem [thread:$0]  %s13, 16, %s586, [#allocation21]
        $region60: #{tpu_custom_call.1} parent=11 // pred_fallthru
          _
        // Predicated region
        $region61: #{tpu_custom_call.1} parent=11 // pred_check
          %p589 = pneg %p363
        $region62: #{tpu_custom_call.1} parent=11 // pred_check_branch
          %591 = sbr.rel (%p589) target = $region64
        $region63: #{tpu_custom_call.1} parent=11 // pred_region
          _
        $region64: #{tpu_custom_call.1} parent=11 // pred_fallthru
          _
        // Predicated region
        $region65: #{tpu_custom_call.1} parent=11 // pred_check
          %p592 = pneg %p384
        $region66: #{tpu_custom_call.1} parent=11 // pred_check_branch
          %594 = sbr.rel (%p592) target = $region68
        $region67: #{tpu_custom_call.1} parent=11 // pred_region
          _
        $region68: #{tpu_custom_call.1} parent=11 // pred_fallthru
          _
        // Predicated region
        $region69: #{tpu_custom_call.1} parent=11 // pred_check
          %p595 = pneg %p405
        $region70: #{tpu_custom_call.1} parent=11 // pred_check_branch
          %597 = sbr.rel (%p595) target = $region72
        $region71: #{tpu_custom_call.1} parent=11 // pred_region
          _
        $region72: #{tpu_custom_call.1} parent=11 // pred_fallthru
          _
        // Predicated region
        $region73: #{tpu_custom_call.1} parent=11 // pred_check
          %p598 = pneg %p426
        $region74: #{tpu_custom_call.1} parent=11 // pred_check_branch
          %600 = sbr.rel (%p598) target = $region76
        $region75: #{tpu_custom_call.1} parent=11 // pred_region
          %s602 = ssub.s32 128, 128
          %603 = vsyncadd [#allocation21], %s602
          %s605 = sshll.u32 [#allocation22], 4
          %s606 = int_to_ptr.vmem [resolvable:$true] %s605
          %608 = dma.hbm_to_vmem [thread:$0]  %s17, 128, %s606, [#allocation21]
        $region76: #{tpu_custom_call.1} parent=11 // pred_fallthru
          _
      $region12: #{tpu_custom_call.1} parent=5 // pred_fallthru
        _
      %p609 = scmp.lt.s32.totalorder %s38, 2
      // Predicated region
      $region77: #{tpu_custom_call.1} parent=5 // pred_check
        %p610 = pneg %p609
      $region78: #{tpu_custom_call.1} parent=5 // pred_check_branch
        %612 = sbr.rel (%p610) target = $region80
      $region79: #{tpu_custom_call.1} parent=5 // pred_region
        // Predicated region
        $region81: #{tpu_custom_call.1} parent=79 // pred_check
          %p613 = pneg %p58
        $region82: #{tpu_custom_call.1} parent=79 // pred_check_branch
          %615 = sbr.rel (%p613) target = $region84
        $region83: #{tpu_custom_call.1} parent=79 // pred_region
          %s616 = sand.u32 %s48, 1
          %s617 = scalar_lea.sflag [#allocation3], %s616
          %s618 = sand.u32 %s48, 1
          %s619 = smul.addr %s618, 8
          %s620 = scalar_lea.vmem [#allocation2], %s619
          %s622 = ssub.s32 128, 128
          %623 = vsyncadd %s617, %s622
          %s624 = smul.addr %s38, 128
          %s625 = scalar_lea.hbm %s0, %s624
          %s627 = sshll.u32 %s620, 4
          %s628 = int_to_ptr.vmem [resolvable:$true] %s627
          %630 = dma.hbm_to_vmem [thread:$0]  %s625, 128, %s628, %s617
        $region84: #{tpu_custom_call.1} parent=79 // pred_fallthru
          _
        // Predicated region
        $region85: #{tpu_custom_call.1} parent=79 // pred_check
          %p631 = pneg %p84
        $region86: #{tpu_custom_call.1} parent=79 // pred_check_branch
          %633 = sbr.rel (%p631) target = $region88
        $region87: #{tpu_custom_call.1} parent=79 // pred_region
          %s634 = sand.u32 %s38, 1
          %s635 = scalar_lea.sflag [#allocation6], %s634
          %s636 = sand.u32 %s74, 1
          %s637 = smul.addr %s636, 8
          %s638 = scalar_lea.vmem [#allocation5], %s637
          %s640 = ssub.s32 128, 128
          %641 = vsyncadd %s635, %s640
          %s642 = smul.addr %s38, 128
          %s643 = scalar_lea.hbm %s1, %s642
          %s645 = sshll.u32 %s638, 4
          %s646 = int_to_ptr.vmem [resolvable:$true] %s645
          %648 = dma.hbm_to_vmem [thread:$0]  %s643, 128, %s646, %s635
        $region88: #{tpu_custom_call.1} parent=79 // pred_fallthru
          _
      $region80: #{tpu_custom_call.1} parent=5 // pred_fallthru
        _
      %p649 = scmp.le.s32.totalorder 1, %s38
      %p650 = scmp.lt.s32.totalorder %s38, 3
      %p651 = pnand %p649, %p650
      %p652 = pneg %p651
      // Predicated region
      $region89: #{tpu_custom_call.1} parent=5 // pred_check
        _
      $region90: #{tpu_custom_call.1} parent=5 // pred_check_branch
        %654 = sbr.rel (%p651) target = $region92
      $region91: #{tpu_custom_call.1} parent=5 // pred_region
        %s655 = ssub.s32 %s38, 1
        %s656 = sand.u32 %s51, 1
        %s657 = scalar_lea.sflag [#allocation3], %s656
        %s658 = sand.u32 %s51, 1
        %s659 = smul.addr %s658, 8
        %s660 = scalar_lea.vmem [#allocation2], %s659
        // Predicated region
        $region93: #{tpu_custom_call.1} parent=91 // pred_check
          %p661 = pneg %p64
        $region94: #{tpu_custom_call.1} parent=91 // pred_check_branch
          %663 = sbr.rel (%p661) target = $region96
        $region95: #{tpu_custom_call.1} parent=91 // pred_region
          %664 = dma.done %s657, 128
        $region96: #{tpu_custom_call.1} parent=91 // pred_fallthru
          _
        %s665 = sand.u32 %s43, 1
        %s666 = scalar_lea.sflag [#allocation6], %s665
        %s667 = sand.u32 %s77, 1
        %s668 = smul.addr %s667, 8
        %s669 = scalar_lea.vmem [#allocation5], %s668
        // Predicated region
        $region97: #{tpu_custom_call.1} parent=91 // pred_check
          %p670 = pneg %p90
        $region98: #{tpu_custom_call.1} parent=91 // pred_check_branch
          %672 = sbr.rel (%p670) target = $region100
        $region99: #{tpu_custom_call.1} parent=91 // pred_region
          %673 = dma.done %s666, 128
        $region100: #{tpu_custom_call.1} parent=91 // pred_fallthru
          _
        // Predicated region
        $region101: #{tpu_custom_call.1} parent=91 // pred_check
          %p674 = pneg %p111
        $region102: #{tpu_custom_call.1} parent=91 // pred_check_branch
          %676 = sbr.rel (%p674) target = $region104
        $region103: #{tpu_custom_call.1} parent=91 // pred_region
          %677 = dma.done [#allocation6], 256
        $region104: #{tpu_custom_call.1} parent=91 // pred_fallthru
          _
        // Predicated region
        $region105: #{tpu_custom_call.1} parent=91 // pred_check
          %p678 = pneg %p153
        $region106: #{tpu_custom_call.1} parent=91 // pred_check_branch
          %680 = sbr.rel (%p678) target = $region108
        $region107: #{tpu_custom_call.1} parent=91 // pred_region
          %681 = dma.done [#allocation9], 256
        $region108: #{tpu_custom_call.1} parent=91 // pred_fallthru
          _
        // Predicated region
        $region109: #{tpu_custom_call.1} parent=91 // pred_check
          %p682 = pneg %p174
        $region110: #{tpu_custom_call.1} parent=91 // pred_check_branch
          %684 = sbr.rel (%p682) target = $region112
        $region111: #{tpu_custom_call.1} parent=91 // pred_region
          %685 = dma.done [#allocation9], 16
        $region112: #{tpu_custom_call.1} parent=91 // pred_fallthru
          _
        // Predicated region
        $region113: #{tpu_custom_call.1} parent=91 // pred_check
          %p686 = pneg %p195
        $region114: #{tpu_custom_call.1} parent=91 // pred_check_branch
          %688 = sbr.rel (%p686) target = $region116
        $region115: #{tpu_custom_call.1} parent=91 // pred_region
          %689 = dma.done [#allocation12], 512
        $region116: #{tpu_custom_call.1} parent=91 // pred_fallthru
          _
        // Predicated region
        $region117: #{tpu_custom_call.1} parent=91 // pred_check
          %p690 = pneg %p216
        $region118: #{tpu_custom_call.1} parent=91 // pred_check_branch
          %692 = sbr.rel (%p690) target = $region120
        $region119: #{tpu_custom_call.1} parent=91 // pred_region
          %693 = dma.done [#allocation12], 16
        $region120: #{tpu_custom_call.1} parent=91 // pred_fallthru
          _
        // Predicated region
        $region121: #{tpu_custom_call.1} parent=91 // pred_check
          %p694 = pneg %p237
        $region122: #{tpu_custom_call.1} parent=91 // pred_check_branch
          %696 = sbr.rel (%p694) target = $region124
        $region123: #{tpu_custom_call.1} parent=91 // pred_region
          %697 = dma.done [#allocation15], 16
        $region124: #{tpu_custom_call.1} parent=91 // pred_fallthru
          _
        // Predicated region
        $region125: #{tpu_custom_call.1} parent=91 // pred_check
          %p698 = pneg %p258
        $region126: #{tpu_custom_call.1} parent=91 // pred_check_branch
          %700 = sbr.rel (%p698) target = $region128
        $region127: #{tpu_custom_call.1} parent=91 // pred_region
          %701 = dma.done [#allocation15], 16
        $region128: #{tpu_custom_call.1} parent=91 // pred_fallthru
          _
        // Predicated region
        $region129: #{tpu_custom_call.1} parent=91 // pred_check
          %p702 = pneg %p300
        $region130: #{tpu_custom_call.1} parent=91 // pred_check_branch
          %704 = sbr.rel (%p702) target = $region132
        $region131: #{tpu_custom_call.1} parent=91 // pred_region
          %705 = dma.done [#allocation18], 16
        $region132: #{tpu_custom_call.1} parent=91 // pred_fallthru
          _
        // Predicated region
        $region133: #{tpu_custom_call.1} parent=91 // pred_check
          %p706 = pneg %p321
        $region134: #{tpu_custom_call.1} parent=91 // pred_check_branch
          %708 = sbr.rel (%p706) target = $region136
        $region135: #{tpu_custom_call.1} parent=91 // pred_region
          %709 = dma.done [#allocation18], 16
        $region136: #{tpu_custom_call.1} parent=91 // pred_fallthru
          _
        // Predicated region
        $region137: #{tpu_custom_call.1} parent=91 // pred_check
          %p710 = pneg %p342
        $region138: #{tpu_custom_call.1} parent=91 // pred_check_branch
          %712 = sbr.rel (%p710) target = $region140
        $region139: #{tpu_custom_call.1} parent=91 // pred_region
          %713 = dma.done [#allocation21], 16
        $region140: #{tpu_custom_call.1} parent=91 // pred_fallthru
          _
        // Predicated region
        $region141: #{tpu_custom_call.1} parent=91 // pred_check
          %p714 = pneg %p426
        $region142: #{tpu_custom_call.1} parent=91 // pred_check_branch
          %716 = sbr.rel (%p714) target = $region144
        $region143: #{tpu_custom_call.1} parent=91 // pred_region
          %717 = dma.done [#allocation21], 128
        $region144: #{tpu_custom_call.1} parent=91 // pred_fallthru
          _
        %s718 = sand.u32 %s51, 1
        %s719 = scalar_lea.sflag [#allocation3], %s718
        %s720 = sand.u32 %s51, 1
        %s721 = smul.addr %s720, 8
        %s722 = scalar_lea.vmem [#allocation2], %s721
        %p723 = pneg %p64
        %p724 = pneg %p61
        %s725 = sand.u32 %s43, 1
        %s726 = scalar_lea.sflag [#allocation6], %s725
        %s727 = sand.u32 %s77, 1
        %s728 = smul.addr %s727, 8
        %s729 = scalar_lea.vmem [#allocation5], %s728
        %p730 = pneg %p90
        %p731 = pneg %p87
        %p732 = pneg %p111
        %p733 = pneg %p108
        %p734 = pneg %p132
        %p735 = pneg %p129
        %p736 = pneg %p153
        %p737 = pneg %p150
        %p738 = pneg %p174
        %p739 = pneg %p171
        %p740 = pneg %p195
        %p741 = pneg %p192
        %p742 = pneg %p216
        %p743 = pneg %p213
        %p744 = pneg %p237
        %p745 = pneg %p234
        %p746 = pneg %p258
        %p747 = pneg %p255
        %p748 = pneg %p279
        %p749 = pneg %p276
        %p750 = pneg %p300
        %p751 = pneg %p297
        %p752 = pneg %p321
        %p753 = pneg %p318
        %p754 = pneg %p342
        %p755 = pneg %p339
        %p756 = pneg %p363
        %p757 = pneg %p360
        %p758 = pneg %p384
        %p759 = pneg %p381
        %p760 = pneg %p405
        %p761 = pneg %p402
        %p762 = pneg %p426
        %p763 = pneg %p423
        %p764 = pneg %p452
        %p765 = pneg %p449
        %s766 = sand.u32 %s439, 1
        %s767 = scalar_lea.sflag [#allocation4], %s766
        %s768 = sand.u32 %s439, 1
        %s769 = smul.addr %s768, 8
        %s770 = scalar_lea.vmem [#allocation23], %s769
        %v771 = vld [vmem:[%s660] sm:$0xff]
        %v772 = vld [vmem:[%s669] sm:$0xff]
        %v773 = vld [vmem:[%s16] sm:$0xff]
        %v774 = vld [vmem:[%s16 + $0x8] sm:$0xff]
        %v775 = vld [vmem:[%s16 + $0x10] sm:$0xff]
        %v776 = vld [vmem:[%s16 + $0x18] sm:$0xff]
        %v777 = vld [vmem:[%s16 + $0x20] sm:$0xff]
        %v778 = vld [vmem:[%s16 + $0x28] sm:$0xff]
        %v779 = vld [vmem:[%s16 + $0x30] sm:$0xff]
        %v780 = vld [vmem:[%s16 + $0x38] sm:$0xff]
        %v781 = vld [vmem:[#allocation22] sm:$0xff]
        %v782 = vxor.u32 %v772, 2147483648
        %v783 = vmul.f32 %v782, 1.442695
        %v784 = vpow.pop %v783
        %v785 = vadd.f32 %v784, 1.0
        %v786 = vrcp.pop %v785
        %v787 = vmul.f32 1.0, %v786
        %v788 = vmul.f32 %v772, %v787
        %v789 = vld [vmem:[#allocation7] sm:$0xff]
        %v790 = vld [vmem:[#allocation7 + $0x8] sm:$0xff]
        %v791 = vld [vmem:[%s3] sm:$0x1]
        %v793 = vlaneseq
        %v794 = vshrl.u32 %v793, 7
        %v795 = vsub.s32 0, %v794
        %v796 = vrot.slane %v791, %v795
        %vm798 = vcmask 130048
        %v800 = vsel %vm798, %v788, 0
        %802 = vmatprep.subr.mxu0 0.0
        %803 = vmatpush1.msra.mxu0 0.0
        %804 = vmatprep.subr.mxu0 0.0
        %805 = vmatpush1.msra.mxu0 0.0
        %806 = vmatprep.subr.mxu0 0.0
        %807 = vmatpush1.msra.mxu0 0.0
        %808 = vmatprep.subr.mxu0 0.0
        %809 = vmatpush1.msra.mxu0 0.0
        %810 = vmatprep.subr.mxu0 0.0
        %811 = vmatpush1.msra.mxu0 0.0
        %812 = vmatprep.subr.mxu0 0.0
        %813 = vmatpush1.msra.mxu0 0.0
        %814 = vmatprep.subr.mxu0 0.0
        %815 = vmatpush1.msra.mxu0 0.0
        %816 = vmatprep.subr.mxu0 0.0
        %817 = vmatpush1.msra.mxu0 0.0
        %818 = vmatprep.subr.mxu0 0.0
        %819 = vmatpush1.msra.mxu0 0.0
        %820 = vmatprep.subr.mxu0 0.0
        %821 = vmatpush1.msra.mxu0 0.0
        %822 = vmatprep.subr.mxu0 0.0
        %823 = vmatpush1.msra.mxu0 0.0
        %824 = vmatprep.subr.mxu0 0.0
        %825 = vmatpush1.msra.mxu0 0.0
        %826 = vmatprep.subr.mxu0 0.0
        %827 = vmatpush1.msra.mxu0 0.0
        %828 = vmatprep.subr.mxu0 0.0
        %829 = vmatpush1.msra.mxu0 0.0
        %830 = vmatprep.subr.mxu0 0.0
        %831 = vmatpush1.msra.mxu0 %v790
        %832 = vmatprep.subr.mxu0 0.0
        %833 = vmatpush1.msra.mxu0 %v789
        %834 = vmatprep.subr.mxu0 0.0
        %835 = vmatpush2.msra.mxu0 0.0
        %836 = vmatprep.subr.mxu0 0.0
        %837 = vmatpush2.msra.mxu0 0.0
        %838 = vmatprep.subr.mxu0 0.0
        %839 = vmatpush2.msra.mxu0 0.0
        %840 = vmatprep.subr.mxu0 0.0
        %841 = vmatpush2.msra.mxu0 0.0
        %842 = vmatprep.subr.mxu0 0.0
        %843 = vmatpush2.msra.mxu0 0.0
        %844 = vmatprep.subr.mxu0 0.0
        %845 = vmatpush2.msra.mxu0 0.0
        %846 = vmatprep.subr.mxu0 0.0
        %847 = vmatpush2.msra.mxu0 0.0
        %848 = vmatprep.subr.mxu0 0.0
        %849 = vmatpush2.msra.mxu0 0.0
        %850 = vmatprep.subr.mxu0 0.0
        %851 = vmatpush2.msra.mxu0 0.0
        %852 = vmatprep.subr.mxu0 0.0
        %853 = vmatpush2.msra.mxu0 0.0
        %854 = vmatprep.subr.mxu0 0.0
        %855 = vmatpush2.msra.mxu0 0.0
        %856 = vmatprep.subr.mxu0 0.0
        %857 = vmatpush2.msra.mxu0 0.0
        %858 = vmatprep.subr.mxu0 0.0
        %859 = vmatpush2.msra.mxu0 0.0
        %860 = vmatprep.subr.mxu0 0.0
        %861 = vmatpush2.msra.mxu0 0.0
        %862 = vmatprep.subr.mxu0 0.0
        %863 = vmatpush2.msra.mxu0 0.0
        %864 = vmatprep.subr.mxu0 0.0
        %865 = vmatpush2.msra.mxu0 0.0
        %866 = vmatprep.mubr.f32.mxu0 0.0
        %867 = vmatmul.mubr.f32.gmra.mxu0 %v800
        %v868 = vpop.f32.mrf.mxu0
        %v869 = vadd.f32 %v796, %v868
        %v870 = vpop.f32.mrf.mxu0
        %871 = vdwg.mxu0
        %v872 = vld [vmem:[#allocation8] sm:$0xff]
        %v873 = vld [vmem:[#allocation8 + $0x8] sm:$0xff]
        %v874 = vld [vmem:[#allocation10] sm:$0x1]
        %v876 = vlaneseq
        %v877 = vshrl.u32 %v876, 7
        %v878 = vsub.s32 0, %v877
        %v879 = vrot.slane %v874, %v878
        %881 = vmatprep.subr.mxu0 0.0
        %882 = vmatpush1.msra.mxu0 0.0
        %883 = vmatprep.subr.mxu0 0.0
        %884 = vmatpush1.msra.mxu0 0.0
        %885 = vmatprep.subr.mxu0 0.0
        %886 = vmatpush1.msra.mxu0 0.0
        %887 = vmatprep.subr.mxu0 0.0
        %888 = vmatpush1.msra.mxu0 0.0
        %889 = vmatprep.subr.mxu0 0.0
        %890 = vmatpush1.msra.mxu0 0.0
        %891 = vmatprep.subr.mxu0 0.0
        %892 = vmatpush1.msra.mxu0 0.0
        %893 = vmatprep.subr.mxu0 0.0
        %894 = vmatpush1.msra.mxu0 0.0
        %895 = vmatprep.subr.mxu0 0.0
        %896 = vmatpush1.msra.mxu0 0.0
        %897 = vmatprep.subr.mxu0 0.0
        %898 = vmatpush1.msra.mxu0 0.0
        %899 = vmatprep.subr.mxu0 0.0
        %900 = vmatpush1.msra.mxu0 0.0
        %901 = vmatprep.subr.mxu0 0.0
        %902 = vmatpush1.msra.mxu0 0.0
        %903 = vmatprep.subr.mxu0 0.0
        %904 = vmatpush1.msra.mxu0 0.0
        %905 = vmatprep.subr.mxu0 0.0
        %906 = vmatpush1.msra.mxu0 0.0
        %907 = vmatprep.subr.mxu0 0.0
        %908 = vmatpush1.msra.mxu0 0.0
        %909 = vmatprep.subr.mxu0 0.0
        %910 = vmatpush1.msra.mxu0 %v873
        %911 = vmatprep.subr.mxu0 0.0
        %912 = vmatpush1.msra.mxu0 %v872
        %913 = vmatprep.subr.mxu0 0.0
        %914 = vmatpush2.msra.mxu0 0.0
        %915 = vmatprep.subr.mxu0 0.0
        %916 = vmatpush2.msra.mxu0 0.0
        %917 = vmatprep.subr.mxu0 0.0
        %918 = vmatpush2.msra.mxu0 0.0
        %919 = vmatprep.subr.mxu0 0.0
        %920 = vmatpush2.msra.mxu0 0.0
        %921 = vmatprep.subr.mxu0 0.0
        %922 = vmatpush2.msra.mxu0 0.0
        %923 = vmatprep.subr.mxu0 0.0
        %924 = vmatpush2.msra.mxu0 0.0
        %925 = vmatprep.subr.mxu0 0.0
        %926 = vmatpush2.msra.mxu0 0.0
        %927 = vmatprep.subr.mxu0 0.0
        %928 = vmatpush2.msra.mxu0 0.0
        %929 = vmatprep.subr.mxu0 0.0
        %930 = vmatpush2.msra.mxu0 0.0
        %931 = vmatprep.subr.mxu0 0.0
        %932 = vmatpush2.msra.mxu0 0.0
        %933 = vmatprep.subr.mxu0 0.0
        %934 = vmatpush2.msra.mxu0 0.0
        %935 = vmatprep.subr.mxu0 0.0
        %936 = vmatpush2.msra.mxu0 0.0
        %937 = vmatprep.subr.mxu0 0.0
        %938 = vmatpush2.msra.mxu0 0.0
        %939 = vmatprep.subr.mxu0 0.0
        %940 = vmatpush2.msra.mxu0 0.0
        %941 = vmatprep.subr.mxu0 0.0
        %942 = vmatpush2.msra.mxu0 0.0
        %943 = vmatprep.subr.mxu0 0.0
        %944 = vmatpush2.msra.mxu0 0.0
        %945 = vmatprep.mubr.f32.mxu0 0.0
        %946 = vmatmul.mubr.f32.gmra.mxu0 %v800
        %v947 = vpop.f32.mrf.mxu0
        %v948 = vadd.f32 %v879, %v947
        %v949 = vpop.f32.mrf.mxu0
        %950 = vdwg.mxu0
        %v951 = vld [vmem:[#allocation11] sm:$0xff]
        %v952 = vld [vmem:[#allocation11 + $0x8] sm:$0xff]
        %v953 = vld [vmem:[#allocation11 + $0x10] sm:$0xff]
        %v954 = vld [vmem:[#allocation11 + $0x18] sm:$0xff]
        %v955 = vld [vmem:[#allocation13] sm:$0x1]
        %v957 = vlaneseq
        %v958 = vshrl.u32 %v957, 7
        %v959 = vsub.s32 0, %v958
        %v960 = vrot.slane %v955, %v959
        %vm962 = vcmask 261120
        %v964 = vsel %vm962, %v771, 0
        %966 = vmatprep.subr.mxu0 0.0
        %967 = vmatpush1.msra.mxu0 0.0
        %968 = vmatprep.subr.mxu0 0.0
        %969 = vmatpush1.msra.mxu0 0.0
        %970 = vmatprep.subr.mxu0 0.0
        %971 = vmatpush1.msra.mxu0 0.0
        %972 = vmatprep.subr.mxu0 0.0
        %973 = vmatpush1.msra.mxu0 0.0
        %974 = vmatprep.subr.mxu0 0.0
        %975 = vmatpush1.msra.mxu0 0.0
        %976 = vmatprep.subr.mxu0 0.0
        %977 = vmatpush1.msra.mxu0 0.0
        %978 = vmatprep.subr.mxu0 0.0
        %979 = vmatpush1.msra.mxu0 0.0
        %980 = vmatprep.subr.mxu0 0.0
        %981 = vmatpush1.msra.mxu0 0.0
        %982 = vmatprep.subr.mxu0 0.0
        %983 = vmatpush1.msra.mxu0 0.0
        %984 = vmatprep.subr.mxu0 0.0
        %985 = vmatpush1.msra.mxu0 0.0
        %986 = vmatprep.subr.mxu0 0.0
        %987 = vmatpush1.msra.mxu0 0.0
        %988 = vmatprep.subr.mxu0 0.0
        %989 = vmatpush1.msra.mxu0 0.0
        %990 = vmatprep.subr.mxu0 0.0
        %991 = vmatpush1.msra.mxu0 %v954
        %992 = vmatprep.subr.mxu0 0.0
        %993 = vmatpush1.msra.mxu0 %v953
        %994 = vmatprep.subr.mxu0 0.0
        %995 = vmatpush1.msra.mxu0 %v952
        %996 = vmatprep.subr.mxu0 0.0
        %997 = vmatpush1.msra.mxu0 %v951
        %998 = vmatprep.subr.mxu0 0.0
        %999 = vmatpush2.msra.mxu0 0.0
        %1000 = vmatprep.subr.mxu0 0.0
        %1001 = vmatpush2.msra.mxu0 0.0
        %1002 = vmatprep.subr.mxu0 0.0
        %1003 = vmatpush2.msra.mxu0 0.0
        %1004 = vmatprep.subr.mxu0 0.0
        %1005 = vmatpush2.msra.mxu0 0.0
        %1006 = vmatprep.subr.mxu0 0.0
        %1007 = vmatpush2.msra.mxu0 0.0
        %1008 = vmatprep.subr.mxu0 0.0
        %1009 = vmatpush2.msra.mxu0 0.0
        %1010 = vmatprep.subr.mxu0 0.0
        %1011 = vmatpush2.msra.mxu0 0.0
        %1012 = vmatprep.subr.mxu0 0.0
        %1013 = vmatpush2.msra.mxu0 0.0
        %1014 = vmatprep.subr.mxu0 0.0
        %1015 = vmatpush2.msra.mxu0 0.0
        %1016 = vmatprep.subr.mxu0 0.0
        %1017 = vmatpush2.msra.mxu0 0.0
        %1018 = vmatprep.subr.mxu0 0.0
        %1019 = vmatpush2.msra.mxu0 0.0
        %1020 = vmatprep.subr.mxu0 0.0
        %1021 = vmatpush2.msra.mxu0 0.0
        %1022 = vmatprep.subr.mxu0 0.0
        %1023 = vmatpush2.msra.mxu0 0.0
        %1024 = vmatprep.subr.mxu0 0.0
        %1025 = vmatpush2.msra.mxu0 0.0
        %1026 = vmatprep.subr.mxu0 0.0
        %1027 = vmatpush2.msra.mxu0 0.0
        %1028 = vmatprep.subr.mxu0 0.0
        %1029 = vmatpush2.msra.mxu0 0.0
        %1030 = vmatprep.mubr.f32.mxu0 0.0
        %1031 = vmatmul.mubr.f32.gmra.mxu0 %v964
        %v1032 = vpop.f32.mrf.mxu0
        %v1033 = vadd.f32 %v960, %v1032
        %v1034 = vpop.f32.mrf.mxu0
        %1035 = vdwg.mxu0
        %v1036 = vld [vmem:[#allocation14] sm:$0x1]
        %v1037 = vld [vmem:[#allocation16] sm:$0x1]
        %vm1038 = vcmask 523264
        %v1040 = vsel %vm1038, %v1033, 0
        %1042 = vmatprep.subr.mxu0 0.0
        %1043 = vmatpush1.msra.mxu0 0.0
        %1044 = vmatprep.subr.mxu0 0.0
        %1045 = vmatpush1.msra.mxu0 0.0
        %1046 = vmatprep.subr.mxu0 0.0
        %1047 = vmatpush1.msra.mxu0 0.0
        %1048 = vmatprep.subr.mxu0 0.0
        %1049 = vmatpush1.msra.mxu0 0.0
        %1050 = vmatprep.subr.mxu0 0.0
        %1051 = vmatpush1.msra.mxu0 0.0
        %1052 = vmatprep.subr.mxu0 0.0
        %1053 = vmatpush1.msra.mxu0 0.0
        %1054 = vmatprep.subr.mxu0 0.0
        %1055 = vmatpush1.msra.mxu0 0.0
        %1056 = vmatprep.subr.mxu0 0.0
        %1057 = vmatpush1.msra.mxu0 0.0
        %1058 = vmatprep.subr.mxu0 0.0
        %1059 = vmatpush1.msra.mxu0 %v780
        %1060 = vmatprep.subr.mxu0 0.0
        %1061 = vmatpush1.msra.mxu0 %v779
        %1062 = vmatprep.subr.mxu0 0.0
        %1063 = vmatpush1.msra.mxu0 %v778
        %1064 = vmatprep.subr.mxu0 0.0
        %1065 = vmatpush1.msra.mxu0 %v777
        %1066 = vmatprep.subr.mxu0 0.0
        %1067 = vmatpush1.msra.mxu0 %v776
        %1068 = vmatprep.subr.mxu0 0.0
        %1069 = vmatpush1.msra.mxu0 %v775
        %1070 = vmatprep.subr.mxu0 0.0
        %1071 = vmatpush1.msra.mxu0 %v774
        %1072 = vmatprep.subr.mxu0 0.0
        %1073 = vmatpush1.msra.mxu0 %v773
        %1074 = vmatprep.subr.mxu0 0.0
        %1075 = vmatpush2.msra.mxu0 0.0
        %1076 = vmatprep.subr.mxu0 0.0
        %1077 = vmatpush2.msra.mxu0 0.0
        %1078 = vmatprep.subr.mxu0 0.0
        %1079 = vmatpush2.msra.mxu0 0.0
        %1080 = vmatprep.subr.mxu0 0.0
        %1081 = vmatpush2.msra.mxu0 0.0
        %1082 = vmatprep.subr.mxu0 0.0
        %1083 = vmatpush2.msra.mxu0 0.0
        %1084 = vmatprep.subr.mxu0 0.0
        %1085 = vmatpush2.msra.mxu0 0.0
        %1086 = vmatprep.subr.mxu0 0.0
        %1087 = vmatpush2.msra.mxu0 0.0
        %1088 = vmatprep.subr.mxu0 0.0
        %1089 = vmatpush2.msra.mxu0 0.0
        %1090 = vmatprep.subr.mxu0 0.0
        %1091 = vmatpush2.msra.mxu0 0.0
        %1092 = vmatprep.subr.mxu0 0.0
        %1093 = vmatpush2.msra.mxu0 0.0
        %1094 = vmatprep.subr.mxu0 0.0
        %1095 = vmatpush2.msra.mxu0 0.0
        %1096 = vmatprep.subr.mxu0 0.0
        %1097 = vmatpush2.msra.mxu0 0.0
        %1098 = vmatprep.subr.mxu0 0.0
        %1099 = vmatpush2.msra.mxu0 0.0
        %1100 = vmatprep.subr.mxu0 0.0
        %1101 = vmatpush2.msra.mxu0 0.0
        %1102 = vmatprep.subr.mxu0 0.0
        %1103 = vmatpush2.msra.mxu0 0.0
        %1104 = vmatprep.subr.mxu0 0.0
        %1105 = vmatpush2.msra.mxu0 0.0
        %1106 = vmatprep.mubr.f32.mxu0 0.0
        %1107 = vmatmul.mubr.f32.gmra.mxu0 %v1040
        %v1108 = vpop.f32.mrf.mxu0
        %v1109 = vadd.f32 0.0, %v1108
        %v1110 = vpop.f32.mrf.mxu0
        %1111 = vdwg.mxu0
        %v1112 = vmul.f32 %v1109, 0.125
        %vm1113 = vcmask 64512
        %v1115 = vsel %vm1113, %v1112, 0
        %1117 = vmatprep.subr.mxu0 0.0
        %1118 = vmatpush1.msra.mxu0 0.0
        %1119 = vmatprep.subr.mxu0 0.0
        %1120 = vmatpush1.msra.mxu0 0.0
        %1121 = vmatprep.subr.mxu0 0.0
        %1122 = vmatpush1.msra.mxu0 0.0
        %1123 = vmatprep.subr.mxu0 0.0
        %1124 = vmatpush1.msra.mxu0 0.0
        %1125 = vmatprep.subr.mxu0 0.0
        %1126 = vmatpush1.msra.mxu0 0.0
        %1127 = vmatprep.subr.mxu0 0.0
        %1128 = vmatpush1.msra.mxu0 0.0
        %1129 = vmatprep.subr.mxu0 0.0
        %1130 = vmatpush1.msra.mxu0 0.0
        %1131 = vmatprep.subr.mxu0 0.0
        %1132 = vmatpush1.msra.mxu0 0.0
        %1133 = vmatprep.subr.mxu0 0.0
        %1134 = vmatpush1.msra.mxu0 0.0
        %1135 = vmatprep.subr.mxu0 0.0
        %1136 = vmatpush1.msra.mxu0 0.0
        %1137 = vmatprep.subr.mxu0 0.0
        %1138 = vmatpush1.msra.mxu0 0.0
        %1139 = vmatprep.subr.mxu0 0.0
        %1140 = vmatpush1.msra.mxu0 0.0
        %1141 = vmatprep.subr.mxu0 0.0
        %1142 = vmatpush1.msra.mxu0 0.0
        %1143 = vmatprep.subr.mxu0 0.0
        %1144 = vmatpush1.msra.mxu0 0.0
        %1145 = vmatprep.subr.mxu0 0.0
        %1146 = vmatpush1.msra.mxu0 0.0
        %1147 = vmatprep.subr.mxu0 0.0
        %1148 = vmatpush1.msra.mxu0 %v781
        %1149 = vmatprep.subr.mxu0 0.0
        %1150 = vmatpush2.msra.mxu0 0.0
        %1151 = vmatprep.subr.mxu0 0.0
        %1152 = vmatpush2.msra.mxu0 0.0
        %1153 = vmatprep.subr.mxu0 0.0
        %1154 = vmatpush2.msra.mxu0 0.0
        %1155 = vmatprep.subr.mxu0 0.0
        %1156 = vmatpush2.msra.mxu0 0.0
        %1157 = vmatprep.subr.mxu0 0.0
        %1158 = vmatpush2.msra.mxu0 0.0
        %1159 = vmatprep.subr.mxu0 0.0
        %1160 = vmatpush2.msra.mxu0 0.0
        %1161 = vmatprep.subr.mxu0 0.0
        %1162 = vmatpush2.msra.mxu0 0.0
        %1163 = vmatprep.subr.mxu0 0.0
        %1164 = vmatpush2.msra.mxu0 0.0
        %1165 = vmatprep.subr.mxu0 0.0
        %1166 = vmatpush2.msra.mxu0 0.0
        %1167 = vmatprep.subr.mxu0 0.0
        %1168 = vmatpush2.msra.mxu0 0.0
        %1169 = vmatprep.subr.mxu0 0.0
        %1170 = vmatpush2.msra.mxu0 0.0
        %1171 = vmatprep.subr.mxu0 0.0
        %1172 = vmatpush2.msra.mxu0 0.0
        %1173 = vmatprep.subr.mxu0 0.0
        %1174 = vmatpush2.msra.mxu0 0.0
        %1175 = vmatprep.subr.mxu0 0.0
        %1176 = vmatpush2.msra.mxu0 0.0
        %1177 = vmatprep.subr.mxu0 0.0
        %1178 = vmatpush2.msra.mxu0 0.0
        %1179 = vmatprep.subr.mxu0 0.0
        %1180 = vmatpush2.msra.mxu0 0.0
        %1181 = vmatprep.mubr.f32.mxu0 0.0
        %1182 = vmatmul.mubr.f32.gmra.mxu0 %v1115
        %v1183 = vpop.f32.mrf.mxu0
        %v1184 = vadd.f32 0.0, %v1183
        %v1185 = vpop.f32.mrf.mxu0
        %1186 = vdwg.mxu0
        %v1187 = vsub.f32 %v1033, %v1184
        %v1188 = vmul.f32 %v1187, %v1187
        %v1190 = vsel %vm1038, %v1188, 0
        %1192 = vmatprep.subr.mxu0 0.0
        %1193 = vmatpush1.msra.mxu0 0.0
        %1194 = vmatprep.subr.mxu0 0.0
        %1195 = vmatpush1.msra.mxu0 0.0
        %1196 = vmatprep.subr.mxu0 0.0
        %1197 = vmatpush1.msra.mxu0 0.0
        %1198 = vmatprep.subr.mxu0 0.0
        %1199 = vmatpush1.msra.mxu0 0.0
        %1200 = vmatprep.subr.mxu0 0.0
        %1201 = vmatpush1.msra.mxu0 0.0
        %1202 = vmatprep.subr.mxu0 0.0
        %1203 = vmatpush1.msra.mxu0 0.0
        %1204 = vmatprep.subr.mxu0 0.0
        %1205 = vmatpush1.msra.mxu0 0.0
        %1206 = vmatprep.subr.mxu0 0.0
        %1207 = vmatpush1.msra.mxu0 0.0
        %1208 = vmatprep.subr.mxu0 0.0
        %1209 = vmatpush1.msra.mxu0 %v780
        %1210 = vmatprep.subr.mxu0 0.0
        %1211 = vmatpush1.msra.mxu0 %v779
        %1212 = vmatprep.subr.mxu0 0.0
        %1213 = vmatpush1.msra.mxu0 %v778
        %1214 = vmatprep.subr.mxu0 0.0
        %1215 = vmatpush1.msra.mxu0 %v777
        %1216 = vmatprep.subr.mxu0 0.0
        %1217 = vmatpush1.msra.mxu0 %v776
        %1218 = vmatprep.subr.mxu0 0.0
        %1219 = vmatpush1.msra.mxu0 %v775
        %1220 = vmatprep.subr.mxu0 0.0
        %1221 = vmatpush1.msra.mxu0 %v774
        %1222 = vmatprep.subr.mxu0 0.0
        %1223 = vmatpush1.msra.mxu0 %v773
        %1224 = vmatprep.subr.mxu0 0.0
        %1225 = vmatpush2.msra.mxu0 0.0
        %1226 = vmatprep.subr.mxu0 0.0
        %1227 = vmatpush2.msra.mxu0 0.0
        %1228 = vmatprep.subr.mxu0 0.0
        %1229 = vmatpush2.msra.mxu0 0.0
        %1230 = vmatprep.subr.mxu0 0.0
        %1231 = vmatpush2.msra.mxu0 0.0
        %1232 = vmatprep.subr.mxu0 0.0
        %1233 = vmatpush2.msra.mxu0 0.0
        %1234 = vmatprep.subr.mxu0 0.0
        %1235 = vmatpush2.msra.mxu0 0.0
        %1236 = vmatprep.subr.mxu0 0.0
        %1237 = vmatpush2.msra.mxu0 0.0
        %1238 = vmatprep.subr.mxu0 0.0
        %1239 = vmatpush2.msra.mxu0 0.0
        %1240 = vmatprep.subr.mxu0 0.0
        %1241 = vmatpush2.msra.mxu0 0.0
        %1242 = vmatprep.subr.mxu0 0.0
        %1243 = vmatpush2.msra.mxu0 0.0
        %1244 = vmatprep.subr.mxu0 0.0
        %1245 = vmatpush2.msra.mxu0 0.0
        %1246 = vmatprep.subr.mxu0 0.0
        %1247 = vmatpush2.msra.mxu0 0.0
        %1248 = vmatprep.subr.mxu0 0.0
        %1249 = vmatpush2.msra.mxu0 0.0
        %1250 = vmatprep.subr.mxu0 0.0
        %1251 = vmatpush2.msra.mxu0 0.0
        %1252 = vmatprep.subr.mxu0 0.0
        %1253 = vmatpush2.msra.mxu0 0.0
        %1254 = vmatprep.subr.mxu0 0.0
        %1255 = vmatpush2.msra.mxu0 0.0
        %1256 = vmatprep.mubr.f32.mxu0 0.0
        %1257 = vmatmul.mubr.f32.gmra.mxu0 %v1190
        %v1258 = vpop.f32.mrf.mxu0
        %v1259 = vadd.f32 0.0, %v1258
        %v1260 = vpop.f32.mrf.mxu0
        %1261 = vdwg.mxu0
        %v1262 = vmul.f32 %v1259, 0.125
        %v1263 = vadd.f32 %v1262, 1e-05
        %v1264 = vrsqrt.pop %v1263
        %v1266 = vsel %vm1113, %v1264, 0
        %1268 = vmatprep.subr.mxu0 0.0
        %1269 = vmatpush1.msra.mxu0 0.0
        %1270 = vmatprep.subr.mxu0 0.0
        %1271 = vmatpush1.msra.mxu0 0.0
        %1272 = vmatprep.subr.mxu0 0.0
        %1273 = vmatpush1.msra.mxu0 0.0
        %1274 = vmatprep.subr.mxu0 0.0
        %1275 = vmatpush1.msra.mxu0 0.0
        %1276 = vmatprep.subr.mxu0 0.0
        %1277 = vmatpush1.msra.mxu0 0.0
        %1278 = vmatprep.subr.mxu0 0.0
        %1279 = vmatpush1.msra.mxu0 0.0
        %1280 = vmatprep.subr.mxu0 0.0
        %1281 = vmatpush1.msra.mxu0 0.0
        %1282 = vmatprep.subr.mxu0 0.0
        %1283 = vmatpush1.msra.mxu0 0.0
        %1284 = vmatprep.subr.mxu0 0.0
        %1285 = vmatpush1.msra.mxu0 0.0
        %1286 = vmatprep.subr.mxu0 0.0
        %1287 = vmatpush1.msra.mxu0 0.0
        %1288 = vmatprep.subr.mxu0 0.0
        %1289 = vmatpush1.msra.mxu0 0.0
        %1290 = vmatprep.subr.mxu0 0.0
        %1291 = vmatpush1.msra.mxu0 0.0
        %1292 = vmatprep.subr.mxu0 0.0
        %1293 = vmatpush1.msra.mxu0 0.0
        %1294 = vmatprep.subr.mxu0 0.0
        %1295 = vmatpush1.msra.mxu0 0.0
        %1296 = vmatprep.subr.mxu0 0.0
        %1297 = vmatpush1.msra.mxu0 0.0
        %1298 = vmatprep.subr.mxu0 0.0
        %1299 = vmatpush1.msra.mxu0 %v781
        %1300 = vmatprep.subr.mxu0 0.0
        %1301 = vmatpush2.msra.mxu0 0.0
        %1302 = vmatprep.subr.mxu0 0.0
        %1303 = vmatpush2.msra.mxu0 0.0
        %1304 = vmatprep.subr.mxu0 0.0
        %1305 = vmatpush2.msra.mxu0 0.0
        %1306 = vmatprep.subr.mxu0 0.0
        %1307 = vmatpush2.msra.mxu0 0.0
        %1308 = vmatprep.subr.mxu0 0.0
        %1309 = vmatpush2.msra.mxu0 0.0
        %1310 = vmatprep.subr.mxu0 0.0
        %1311 = vmatpush2.msra.mxu0 0.0
        %1312 = vmatprep.subr.mxu0 0.0
        %1313 = vmatpush2.msra.mxu0 0.0
        %1314 = vmatprep.subr.mxu0 0.0
        %1315 = vmatpush2.msra.mxu0 0.0
        %1316 = vmatprep.subr.mxu0 0.0
        %1317 = vmatpush2.msra.mxu0 0.0
        %1318 = vmatprep.subr.mxu0 0.0
        %1319 = vmatpush2.msra.mxu0 0.0
        %1320 = vmatprep.subr.mxu0 0.0
        %1321 = vmatpush2.msra.mxu0 0.0
        %1322 = vmatprep.subr.mxu0 0.0
        %1323 = vmatpush2.msra.mxu0 0.0
        %1324 = vmatprep.subr.mxu0 0.0
        %1325 = vmatpush2.msra.mxu0 0.0
        %1326 = vmatprep.subr.mxu0 0.0
        %1327 = vmatpush2.msra.mxu0 0.0
        %1328 = vmatprep.subr.mxu0 0.0
        %1329 = vmatpush2.msra.mxu0 0.0
        %1330 = vmatprep.subr.mxu0 0.0
        %1331 = vmatpush2.msra.mxu0 0.0
        %1332 = vmatprep.mubr.f32.mxu0 0.0
        %1333 = vmatmul.mubr.f32.gmra.mxu0 %v1266
        %v1334 = vpop.f32.mrf.mxu0
        %v1335 = vadd.f32 0.0, %v1334
        %v1336 = vpop.f32.mrf.mxu0
        %1337 = vdwg.mxu0
        %v1338 = vmul.f32 %v1187, %v1335
        %v1340 = vlaneseq
        %v1341 = vshrl.u32 %v1340, 7
        %v1342 = vsub.s32 0, %v1341
        %v1343 = vrot.slane %v1036, %v1342
        %v1345 = vmul.f32 %v1338, %v1343
        %v1347 = vlaneseq
        %v1348 = vshrl.u32 %v1347, 7
        %v1349 = vsub.s32 0, %v1348
        %v1350 = vrot.slane %v1037, %v1349
        %v1352 = vadd.f32 %v1345, %v1350
        %v1353 = vadd.f32 %v869, 1.0
        %v1354 = vmul.f32 %v1352, %v1353
        %v1355 = vadd.f32 %v1354, %v948
        %v1356 = vxor.u32 %v1355, 2147483648
        %v1357 = vmul.f32 %v1356, 1.442695
        %v1358 = vpow.pop %v1357
        %v1359 = vadd.f32 %v1358, 1.0
        %v1360 = vrcp.pop %v1359
        %v1361 = vmul.f32 1.0, %v1360
        %v1362 = vmul.f32 %v1355, %v1361
        %v1363 = vld [vmem:[%s10] sm:$0xff]
        %v1364 = vld [vmem:[%s10 + $0x8] sm:$0xff]
        %v1365 = vld [vmem:[%s10 + $0x10] sm:$0xff]
        %v1366 = vld [vmem:[%s10 + $0x18] sm:$0xff]
        %v1367 = vld [vmem:[%s10 + $0x20] sm:$0xff]
        %v1368 = vld [vmem:[%s10 + $0x28] sm:$0xff]
        %v1369 = vld [vmem:[%s10 + $0x30] sm:$0xff]
        %v1370 = vld [vmem:[%s10 + $0x38] sm:$0xff]
        %v1371 = vld [vmem:[#allocation17] sm:$0x1]
        %v1373 = vlaneseq
        %v1374 = vshrl.u32 %v1373, 7
        %v1375 = vsub.s32 0, %v1374
        %v1376 = vrot.slane %v1371, %v1375
        %v1379 = vsel %vm1038, %v1362, 0
        %1381 = vmatprep.subr.mxu0 0.0
        %1382 = vmatpush1.msra.mxu0 0.0
        %1383 = vmatprep.subr.mxu0 0.0
        %1384 = vmatpush1.msra.mxu0 0.0
        %1385 = vmatprep.subr.mxu0 0.0
        %1386 = vmatpush1.msra.mxu0 0.0
        %1387 = vmatprep.subr.mxu0 0.0
        %1388 = vmatpush1.msra.mxu0 0.0
        %1389 = vmatprep.subr.mxu0 0.0
        %1390 = vmatpush1.msra.mxu0 0.0
        %1391 = vmatprep.subr.mxu0 0.0
        %1392 = vmatpush1.msra.mxu0 0.0
        %1393 = vmatprep.subr.mxu0 0.0
        %1394 = vmatpush1.msra.mxu0 0.0
        %1395 = vmatprep.subr.mxu0 0.0
        %1396 = vmatpush1.msra.mxu0 0.0
        %1397 = vmatprep.subr.mxu0 0.0
        %1398 = vmatpush1.msra.mxu0 %v1370
        %1399 = vmatprep.subr.mxu0 0.0
        %1400 = vmatpush1.msra.mxu0 %v1369
        %1401 = vmatprep.subr.mxu0 0.0
        %1402 = vmatpush1.msra.mxu0 %v1368
        %1403 = vmatprep.subr.mxu0 0.0
        %1404 = vmatpush1.msra.mxu0 %v1367
        %1405 = vmatprep.subr.mxu0 0.0
        %1406 = vmatpush1.msra.mxu0 %v1366
        %1407 = vmatprep.subr.mxu0 0.0
        %1408 = vmatpush1.msra.mxu0 %v1365
        %1409 = vmatprep.subr.mxu0 0.0
        %1410 = vmatpush1.msra.mxu0 %v1364
        %1411 = vmatprep.subr.mxu0 0.0
        %1412 = vmatpush1.msra.mxu0 %v1363
        %1413 = vmatprep.subr.mxu0 0.0
        %1414 = vmatpush2.msra.mxu0 0.0
        %1415 = vmatprep.subr.mxu0 0.0
        %1416 = vmatpush2.msra.mxu0 0.0
        %1417 = vmatprep.subr.mxu0 0.0
        %1418 = vmatpush2.msra.mxu0 0.0
        %1419 = vmatprep.subr.mxu0 0.0
        %1420 = vmatpush2.msra.mxu0 0.0
        %1421 = vmatprep.subr.mxu0 0.0
        %1422 = vmatpush2.msra.mxu0 0.0
        %1423 = vmatprep.subr.mxu0 0.0
        %1424 = vmatpush2.msra.mxu0 0.0
        %1425 = vmatprep.subr.mxu0 0.0
        %1426 = vmatpush2.msra.mxu0 0.0
        %1427 = vmatprep.subr.mxu0 0.0
        %1428 = vmatpush2.msra.mxu0 0.0
        %1429 = vmatprep.subr.mxu0 0.0
        %1430 = vmatpush2.msra.mxu0 0.0
        %1431 = vmatprep.subr.mxu0 0.0
        %1432 = vmatpush2.msra.mxu0 0.0
        %1433 = vmatprep.subr.mxu0 0.0
        %1434 = vmatpush2.msra.mxu0 0.0
        %1435 = vmatprep.subr.mxu0 0.0
        %1436 = vmatpush2.msra.mxu0 0.0
        %1437 = vmatprep.subr.mxu0 0.0
        %1438 = vmatpush2.msra.mxu0 0.0
        %1439 = vmatprep.subr.mxu0 0.0
        %1440 = vmatpush2.msra.mxu0 0.0
        %1441 = vmatprep.subr.mxu0 0.0
        %1442 = vmatpush2.msra.mxu0 0.0
        %1443 = vmatprep.subr.mxu0 0.0
        %1444 = vmatpush2.msra.mxu0 0.0
        %1445 = vmatprep.mubr.f32.mxu0 0.0
        %1446 = vmatmul.mubr.f32.gmra.mxu0 %v1379
        %v1447 = vpop.f32.mrf.mxu0
        %v1448 = vadd.f32 %v1376, %v1447
        %v1449 = vpop.f32.mrf.mxu0
        %1450 = vdwg.mxu0
        %v1451 = vld [vmem:[#allocation19] sm:$0x1]
        %v1452 = vld [vmem:[#allocation20] sm:$0x1]
        %v1454 = vsel %vm1038, %v1448, 0
        %1456 = vmatprep.subr.mxu0 0.0
        %1457 = vmatpush1.msra.mxu0 0.0
        %1458 = vmatprep.subr.mxu0 0.0
        %1459 = vmatpush1.msra.mxu0 0.0
        %1460 = vmatprep.subr.mxu0 0.0
        %1461 = vmatpush1.msra.mxu0 0.0
        %1462 = vmatprep.subr.mxu0 0.0
        %1463 = vmatpush1.msra.mxu0 0.0
        %1464 = vmatprep.subr.mxu0 0.0
        %1465 = vmatpush1.msra.mxu0 0.0
        %1466 = vmatprep.subr.mxu0 0.0
        %1467 = vmatpush1.msra.mxu0 0.0
        %1468 = vmatprep.subr.mxu0 0.0
        %1469 = vmatpush1.msra.mxu0 0.0
        %1470 = vmatprep.subr.mxu0 0.0
        %1471 = vmatpush1.msra.mxu0 0.0
        %1472 = vmatprep.subr.mxu0 0.0
        %1473 = vmatpush1.msra.mxu0 %v780
        %1474 = vmatprep.subr.mxu0 0.0
        %1475 = vmatpush1.msra.mxu0 %v779
        %1476 = vmatprep.subr.mxu0 0.0
        %1477 = vmatpush1.msra.mxu0 %v778
        %1478 = vmatprep.subr.mxu0 0.0
        %1479 = vmatpush1.msra.mxu0 %v777
        %1480 = vmatprep.subr.mxu0 0.0
        %1481 = vmatpush1.msra.mxu0 %v776
        %1482 = vmatprep.subr.mxu0 0.0
        %1483 = vmatpush1.msra.mxu0 %v775
        %1484 = vmatprep.subr.mxu0 0.0
        %1485 = vmatpush1.msra.mxu0 %v774
        %1486 = vmatprep.subr.mxu0 0.0
        %1487 = vmatpush1.msra.mxu0 %v773
        %1488 = vmatprep.subr.mxu0 0.0
        %1489 = vmatpush2.msra.mxu0 0.0
        %1490 = vmatprep.subr.mxu0 0.0
        %1491 = vmatpush2.msra.mxu0 0.0
        %1492 = vmatprep.subr.mxu0 0.0
        %1493 = vmatpush2.msra.mxu0 0.0
        %1494 = vmatprep.subr.mxu0 0.0
        %1495 = vmatpush2.msra.mxu0 0.0
        %1496 = vmatprep.subr.mxu0 0.0
        %1497 = vmatpush2.msra.mxu0 0.0
        %1498 = vmatprep.subr.mxu0 0.0
        %1499 = vmatpush2.msra.mxu0 0.0
        %1500 = vmatprep.subr.mxu0 0.0
        %1501 = vmatpush2.msra.mxu0 0.0
        %1502 = vmatprep.subr.mxu0 0.0
        %1503 = vmatpush2.msra.mxu0 0.0
        %1504 = vmatprep.subr.mxu0 0.0
        %1505 = vmatpush2.msra.mxu0 0.0
        %1506 = vmatprep.subr.mxu0 0.0
        %1507 = vmatpush2.msra.mxu0 0.0
        %1508 = vmatprep.subr.mxu0 0.0
        %1509 = vmatpush2.msra.mxu0 0.0
        %1510 = vmatprep.subr.mxu0 0.0
        %1511 = vmatpush2.msra.mxu0 0.0
        %1512 = vmatprep.subr.mxu0 0.0
        %1513 = vmatpush2.msra.mxu0 0.0
        %1514 = vmatprep.subr.mxu0 0.0
        %1515 = vmatpush2.msra.mxu0 0.0
        %1516 = vmatprep.subr.mxu0 0.0
        %1517 = vmatpush2.msra.mxu0 0.0
        %1518 = vmatprep.subr.mxu0 0.0
        %1519 = vmatpush2.msra.mxu0 0.0
        %1520 = vmatprep.mubr.f32.mxu0 0.0
        %1521 = vmatmul.mubr.f32.gmra.mxu0 %v1454
        %v1522 = vpop.f32.mrf.mxu0
        %v1523 = vadd.f32 0.0, %v1522
        %v1524 = vpop.f32.mrf.mxu0
        %1525 = vdwg.mxu0
        %v1526 = vmul.f32 %v1523, 0.125
        %v1528 = vsel %vm1113, %v1526, 0
        %1530 = vmatprep.subr.mxu0 0.0
        %1531 = vmatpush1.msra.mxu0 0.0
        %1532 = vmatprep.subr.mxu0 0.0
        %1533 = vmatpush1.msra.mxu0 0.0
        %1534 = vmatprep.subr.mxu0 0.0
        %1535 = vmatpush1.msra.mxu0 0.0
        %1536 = vmatprep.subr.mxu0 0.0
        %1537 = vmatpush1.msra.mxu0 0.0
        %1538 = vmatprep.subr.mxu0 0.0
        %1539 = vmatpush1.msra.mxu0 0.0
        %1540 = vmatprep.subr.mxu0 0.0
        %1541 = vmatpush1.msra.mxu0 0.0
        %1542 = vmatprep.subr.mxu0 0.0
        %1543 = vmatpush1.msra.mxu0 0.0
        %1544 = vmatprep.subr.mxu0 0.0
        %1545 = vmatpush1.msra.mxu0 0.0
        %1546 = vmatprep.subr.mxu0 0.0
        %1547 = vmatpush1.msra.mxu0 0.0
        %1548 = vmatprep.subr.mxu0 0.0
        %1549 = vmatpush1.msra.mxu0 0.0
        %1550 = vmatprep.subr.mxu0 0.0
        %1551 = vmatpush1.msra.mxu0 0.0
        %1552 = vmatprep.subr.mxu0 0.0
        %1553 = vmatpush1.msra.mxu0 0.0
        %1554 = vmatprep.subr.mxu0 0.0
        %1555 = vmatpush1.msra.mxu0 0.0
        %1556 = vmatprep.subr.mxu0 0.0
        %1557 = vmatpush1.msra.mxu0 0.0
        %1558 = vmatprep.subr.mxu0 0.0
        %1559 = vmatpush1.msra.mxu0 0.0
        %1560 = vmatprep.subr.mxu0 0.0
        %1561 = vmatpush1.msra.mxu0 %v781
        %1562 = vmatprep.subr.mxu0 0.0
        %1563 = vmatpush2.msra.mxu0 0.0
        %1564 = vmatprep.subr.mxu0 0.0
        %1565 = vmatpush2.msra.mxu0 0.0
        %1566 = vmatprep.subr.mxu0 0.0
        %1567 = vmatpush2.msra.mxu0 0.0
        %1568 = vmatprep.subr.mxu0 0.0
        %1569 = vmatpush2.msra.mxu0 0.0
        %1570 = vmatprep.subr.mxu0 0.0
        %1571 = vmatpush2.msra.mxu0 0.0
        %1572 = vmatprep.subr.mxu0 0.0
        %1573 = vmatpush2.msra.mxu0 0.0
        %1574 = vmatprep.subr.mxu0 0.0
        %1575 = vmatpush2.msra.mxu0 0.0
        %1576 = vmatprep.subr.mxu0 0.0
        %1577 = vmatpush2.msra.mxu0 0.0
        %1578 = vmatprep.subr.mxu0 0.0
        %1579 = vmatpush2.msra.mxu0 0.0
        %1580 = vmatprep.subr.mxu0 0.0
        %1581 = vmatpush2.msra.mxu0 0.0
        %1582 = vmatprep.subr.mxu0 0.0
        %1583 = vmatpush2.msra.mxu0 0.0
        %1584 = vmatprep.subr.mxu0 0.0
        %1585 = vmatpush2.msra.mxu0 0.0
        %1586 = vmatprep.subr.mxu0 0.0
        %1587 = vmatpush2.msra.mxu0 0.0
        %1588 = vmatprep.subr.mxu0 0.0
        %1589 = vmatpush2.msra.mxu0 0.0
        %1590 = vmatprep.subr.mxu0 0.0
        %1591 = vmatpush2.msra.mxu0 0.0
        %1592 = vmatprep.subr.mxu0 0.0
        %1593 = vmatpush2.msra.mxu0 0.0
        %1594 = vmatprep.mubr.f32.mxu0 0.0
        %1595 = vmatmul.mubr.f32.gmra.mxu0 %v1528
        %v1596 = vpop.f32.mrf.mxu0
        %v1597 = vadd.f32 0.0, %v1596
        %v1598 = vpop.f32.mrf.mxu0
        %1599 = vdwg.mxu0
        %v1600 = vsub.f32 %v1448, %v1597
        %v1601 = vmul.f32 %v1600, %v1600
        %v1603 = vsel %vm1038, %v1601, 0
        %1605 = vmatprep.subr.mxu0 0.0
        %1606 = vmatpush1.msra.mxu0 0.0
        %1607 = vmatprep.subr.mxu0 0.0
        %1608 = vmatpush1.msra.mxu0 0.0
        %1609 = vmatprep.subr.mxu0 0.0
        %1610 = vmatpush1.msra.mxu0 0.0
        %1611 = vmatprep.subr.mxu0 0.0
        %1612 = vmatpush1.msra.mxu0 0.0
        %1613 = vmatprep.subr.mxu0 0.0
        %1614 = vmatpush1.msra.mxu0 0.0
        %1615 = vmatprep.subr.mxu0 0.0
        %1616 = vmatpush1.msra.mxu0 0.0
        %1617 = vmatprep.subr.mxu0 0.0
        %1618 = vmatpush1.msra.mxu0 0.0
        %1619 = vmatprep.subr.mxu0 0.0
        %1620 = vmatpush1.msra.mxu0 0.0
        %1621 = vmatprep.subr.mxu0 0.0
        %1622 = vmatpush1.msra.mxu0 %v780
        %1623 = vmatprep.subr.mxu0 0.0
        %1624 = vmatpush1.msra.mxu0 %v779
        %1625 = vmatprep.subr.mxu0 0.0
        %1626 = vmatpush1.msra.mxu0 %v778
        %1627 = vmatprep.subr.mxu0 0.0
        %1628 = vmatpush1.msra.mxu0 %v777
        %1629 = vmatprep.subr.mxu0 0.0
        %1630 = vmatpush1.msra.mxu0 %v776
        %1631 = vmatprep.subr.mxu0 0.0
        %1632 = vmatpush1.msra.mxu0 %v775
        %1633 = vmatprep.subr.mxu0 0.0
        %1634 = vmatpush1.msra.mxu0 %v774
        %1635 = vmatprep.subr.mxu0 0.0
        %1636 = vmatpush1.msra.mxu0 %v773
        %1637 = vmatprep.subr.mxu0 0.0
        %1638 = vmatpush2.msra.mxu0 0.0
        %1639 = vmatprep.subr.mxu0 0.0
        %1640 = vmatpush2.msra.mxu0 0.0
        %1641 = vmatprep.subr.mxu0 0.0
        %1642 = vmatpush2.msra.mxu0 0.0
        %1643 = vmatprep.subr.mxu0 0.0
        %1644 = vmatpush2.msra.mxu0 0.0
        %1645 = vmatprep.subr.mxu0 0.0
        %1646 = vmatpush2.msra.mxu0 0.0
        %1647 = vmatprep.subr.mxu0 0.0
        %1648 = vmatpush2.msra.mxu0 0.0
        %1649 = vmatprep.subr.mxu0 0.0
        %1650 = vmatpush2.msra.mxu0 0.0
        %1651 = vmatprep.subr.mxu0 0.0
        %1652 = vmatpush2.msra.mxu0 0.0
        %1653 = vmatprep.subr.mxu0 0.0
        %1654 = vmatpush2.msra.mxu0 0.0
        %1655 = vmatprep.subr.mxu0 0.0
        %1656 = vmatpush2.msra.mxu0 0.0
        %1657 = vmatprep.subr.mxu0 0.0
        %1658 = vmatpush2.msra.mxu0 0.0
        %1659 = vmatprep.subr.mxu0 0.0
        %1660 = vmatpush2.msra.mxu0 0.0
        %1661 = vmatprep.subr.mxu0 0.0
        %1662 = vmatpush2.msra.mxu0 0.0
        %1663 = vmatprep.subr.mxu0 0.0
        %1664 = vmatpush2.msra.mxu0 0.0
        %1665 = vmatprep.subr.mxu0 0.0
        %1666 = vmatpush2.msra.mxu0 0.0
        %1667 = vmatprep.subr.mxu0 0.0
        %1668 = vmatpush2.msra.mxu0 0.0
        %1669 = vmatprep.mubr.f32.mxu0 0.0
        %1670 = vmatmul.mubr.f32.gmra.mxu0 %v1603
        %v1671 = vpop.f32.mrf.mxu0
        %v1672 = vadd.f32 0.0, %v1671
        %v1673 = vpop.f32.mrf.mxu0
        %1674 = vdwg.mxu0
        %v1675 = vmul.f32 %v1672, 0.125
        %v1676 = vadd.f32 %v1675, 1e-05
        %v1677 = vrsqrt.pop %v1676
        %v1679 = vsel %vm1113, %v1677, 0
        %1681 = vmatprep.subr.mxu0 0.0
        %1682 = vmatpush1.msra.mxu0 0.0
        %1683 = vmatprep.subr.mxu0 0.0
        %1684 = vmatpush1.msra.mxu0 0.0
        %1685 = vmatprep.subr.mxu0 0.0
        %1686 = vmatpush1.msra.mxu0 0.0
        %1687 = vmatprep.subr.mxu0 0.0
        %1688 = vmatpush1.msra.mxu0 0.0
        %1689 = vmatprep.subr.mxu0 0.0
        %1690 = vmatpush1.msra.mxu0 0.0
        %1691 = vmatprep.subr.mxu0 0.0
        %1692 = vmatpush1.msra.mxu0 0.0
        %1693 = vmatprep.subr.mxu0 0.0
        %1694 = vmatpush1.msra.mxu0 0.0
        %1695 = vmatprep.subr.mxu0 0.0
        %1696 = vmatpush1.msra.mxu0 0.0
        %1697 = vmatprep.subr.mxu0 0.0
        %1698 = vmatpush1.msra.mxu0 0.0
        %1699 = vmatprep.subr.mxu0 0.0
        %1700 = vmatpush1.msra.mxu0 0.0
        %1701 = vmatprep.subr.mxu0 0.0
        %1702 = vmatpush1.msra.mxu0 0.0
        %1703 = vmatprep.subr.mxu0 0.0
        %1704 = vmatpush1.msra.mxu0 0.0
        %1705 = vmatprep.subr.mxu0 0.0
        %1706 = vmatpush1.msra.mxu0 0.0
        %1707 = vmatprep.subr.mxu0 0.0
        %1708 = vmatpush1.msra.mxu0 0.0
        %1709 = vmatprep.subr.mxu0 0.0
        %1710 = vmatpush1.msra.mxu0 0.0
        %1711 = vmatprep.subr.mxu0 0.0
        %1712 = vmatpush1.msra.mxu0 %v781
        %1713 = vmatprep.subr.mxu0 0.0
        %1714 = vmatpush2.msra.mxu0 0.0
        %1715 = vmatprep.subr.mxu0 0.0
        %1716 = vmatpush2.msra.mxu0 0.0
        %1717 = vmatprep.subr.mxu0 0.0
        %1718 = vmatpush2.msra.mxu0 0.0
        %1719 = vmatprep.subr.mxu0 0.0
        %1720 = vmatpush2.msra.mxu0 0.0
        %1721 = vmatprep.subr.mxu0 0.0
        %1722 = vmatpush2.msra.mxu0 0.0
        %1723 = vmatprep.subr.mxu0 0.0
        %1724 = vmatpush2.msra.mxu0 0.0
        %1725 = vmatprep.subr.mxu0 0.0
        %1726 = vmatpush2.msra.mxu0 0.0
        %1727 = vmatprep.subr.mxu0 0.0
        %1728 = vmatpush2.msra.mxu0 0.0
        %1729 = vmatprep.subr.mxu0 0.0
        %1730 = vmatpush2.msra.mxu0 0.0
        %1731 = vmatprep.subr.mxu0 0.0
        %1732 = vmatpush2.msra.mxu0 0.0
        %1733 = vmatprep.subr.mxu0 0.0
        %1734 = vmatpush2.msra.mxu0 0.0
        %1735 = vmatprep.subr.mxu0 0.0
        %1736 = vmatpush2.msra.mxu0 0.0
        %1737 = vmatprep.subr.mxu0 0.0
        %1738 = vmatpush2.msra.mxu0 0.0
        %1739 = vmatprep.subr.mxu0 0.0
        %1740 = vmatpush2.msra.mxu0 0.0
        %1741 = vmatprep.subr.mxu0 0.0
        %1742 = vmatpush2.msra.mxu0 0.0
        %1743 = vmatprep.subr.mxu0 0.0
        %1744 = vmatpush2.msra.mxu0 0.0
        %1745 = vmatprep.mubr.f32.mxu0 0.0
        %1746 = vmatmul.mubr.f32.gmra.mxu0 %v1679
        %v1747 = vpop.f32.mrf.mxu0
        %v1748 = vadd.f32 0.0, %v1747
        %v1749 = vpop.f32.mrf.mxu0
        %1750 = vdwg.mxu0
        %v1751 = vmul.f32 %v1600, %v1748
        %v1753 = vlaneseq
        %v1754 = vshrl.u32 %v1753, 7
        %v1755 = vsub.s32 0, %v1754
        %v1756 = vrot.slane %v1451, %v1755
        %v1758 = vmul.f32 %v1751, %v1756
        %v1760 = vlaneseq
        %v1761 = vshrl.u32 %v1760, 7
        %v1762 = vsub.s32 0, %v1761
        %v1763 = vrot.slane %v1452, %v1762
        %v1765 = vadd.f32 %v1758, %v1763
        %v1766 = vxor.u32 %v1765, 2147483648
        %v1767 = vmul.f32 %v1766, 1.442695
        %v1768 = vpow.pop %v1767
        %v1769 = vadd.f32 %v1768, 1.0
        %v1770 = vrcp.pop %v1769
        %v1771 = vmul.f32 1.0, %v1770
        %v1772 = vmul.f32 %v1765, %v1771
        %v1773 = vld [vmem:[%s14] sm:$0xff]
        %v1774 = vld [vmem:[%s14 + $0x8] sm:$0xff]
        %v1775 = vld [vmem:[%s14 + $0x10] sm:$0xff]
        %v1776 = vld [vmem:[%s14 + $0x18] sm:$0xff]
        %v1777 = vld [vmem:[%s15] sm:$0x1]
        %v1779 = vlaneseq
        %v1780 = vshrl.u32 %v1779, 7
        %v1781 = vsub.s32 0, %v1780
        %v1782 = vrot.slane %v1777, %v1781
        %1784 = vmatprep.subr.mxu0 0.0
        %1785 = vmatpush1.msra.mxu0 0.0
        %1786 = vmatprep.subr.mxu0 0.0
        %1787 = vmatpush1.msra.mxu0 0.0
        %1788 = vmatprep.subr.mxu0 0.0
        %1789 = vmatpush1.msra.mxu0 0.0
        %1790 = vmatprep.subr.mxu0 0.0
        %1791 = vmatpush1.msra.mxu0 0.0
        %1792 = vmatprep.subr.mxu0 0.0
        %1793 = vmatpush1.msra.mxu0 0.0
        %1794 = vmatprep.subr.mxu0 0.0
        %1795 = vmatpush1.msra.mxu0 0.0
        %1796 = vmatprep.subr.mxu0 0.0
        %1797 = vmatpush1.msra.mxu0 0.0
        %1798 = vmatprep.subr.mxu0 0.0
        %1799 = vmatpush1.msra.mxu0 0.0
        %1800 = vmatprep.subr.mxu0 0.0
        %1801 = vmatpush1.msra.mxu0 0.0
        %1802 = vmatprep.subr.mxu0 0.0
        %1803 = vmatpush1.msra.mxu0 0.0
        %1804 = vmatprep.subr.mxu0 0.0
        %1805 = vmatpush1.msra.mxu0 0.0
        %1806 = vmatprep.subr.mxu0 0.0
        %1807 = vmatpush1.msra.mxu0 0.0
        %1808 = vmatprep.subr.mxu0 0.0
        %1809 = vmatpush1.msra.mxu0 %v1776
        %1810 = vmatprep.subr.mxu0 0.0
        %1811 = vmatpush1.msra.mxu0 %v1775
        %1812 = vmatprep.subr.mxu0 0.0
        %1813 = vmatpush1.msra.mxu0 %v1774
        %1814 = vmatprep.subr.mxu0 0.0
        %1815 = vmatpush1.msra.mxu0 %v1773
        %1816 = vmatprep.subr.mxu0 0.0
        %1817 = vmatpush2.msra.mxu0 0.0
        %1818 = vmatprep.subr.mxu0 0.0
        %1819 = vmatpush2.msra.mxu0 0.0
        %1820 = vmatprep.subr.mxu0 0.0
        %1821 = vmatpush2.msra.mxu0 0.0
        %1822 = vmatprep.subr.mxu0 0.0
        %1823 = vmatpush2.msra.mxu0 0.0
        %1824 = vmatprep.subr.mxu0 0.0
        %1825 = vmatpush2.msra.mxu0 0.0
        %1826 = vmatprep.subr.mxu0 0.0
        %1827 = vmatpush2.msra.mxu0 0.0
        %1828 = vmatprep.subr.mxu0 0.0
        %1829 = vmatpush2.msra.mxu0 0.0
        %1830 = vmatprep.subr.mxu0 0.0
        %1831 = vmatpush2.msra.mxu0 0.0
        %1832 = vmatprep.subr.mxu0 0.0
        %1833 = vmatpush2.msra.mxu0 0.0
        %1834 = vmatprep.subr.mxu0 0.0
        %1835 = vmatpush2.msra.mxu0 0.0
        %1836 = vmatprep.subr.mxu0 0.0
        %1837 = vmatpush2.msra.mxu0 0.0
        %1838 = vmatprep.subr.mxu0 0.0
        %1839 = vmatpush2.msra.mxu0 0.0
        %1840 = vmatprep.subr.mxu0 0.0
        %1841 = vmatpush2.msra.mxu0 0.0
        %1842 = vmatprep.subr.mxu0 0.0
        %1843 = vmatpush2.msra.mxu0 0.0
        %1844 = vmatprep.subr.mxu0 0.0
        %1845 = vmatpush2.msra.mxu0 0.0
        %1846 = vmatprep.subr.mxu0 0.0
        %1847 = vmatpush2.msra.mxu0 0.0
        %1848 = vmatprep.mubr.f32.mxu0 0.0
        %1849 = vmatmul.mubr.f32.gmra.mxu0 %v964
        %v1850 = vpop.f32.mrf.mxu0
        %v1851 = vadd.f32 %v1782, %v1850
        %v1852 = vpop.f32.mrf.mxu0
        %1853 = vdwg.mxu0
        %v1854 = vadd.f32 %v1772, %v1851
        %1855 = vst.msk [vmem:[%s770] sm:$0xff] %vm1038, %v1854
        %s1856 = sand.u32 %s439, 1
        %s1857 = scalar_lea.sflag [#allocation4], %s1856
        %s1858 = sand.u32 %s439, 1
        %s1859 = smul.addr %s1858, 8
        %s1860 = scalar_lea.vmem [#allocation23], %s1859
        // Predicated region
        $region145: #{tpu_custom_call.1} parent=91 // pred_check
          %p1861 = pneg %p449
        $region146: #{tpu_custom_call.1} parent=91 // pred_check_branch
          %1863 = sbr.rel (%p1861) target = $region148
        $region147: #{tpu_custom_call.1} parent=91 // pred_region
          %s1865 = ssub.s32 128, 128
          %1866 = vsyncadd %s1857, %s1865
          %s1867 = smul.addr %s43, 128
          %s1868 = scalar_lea.hbm %s18, %s1867
          %s1870 = sshll.u32 %s1860, 4
          %s1871 = int_to_ptr.vmem [resolvable:$true] %s1870
          %1873 = dma.vmem_to_hbm [thread:$0]  %s1871, 128, %s1868, %s1857
        $region148: #{tpu_custom_call.1} parent=91 // pred_fallthru
          _
      $region92: #{tpu_custom_call.1} parent=5 // pred_fallthru
        _
      %p1874 = scmp.le.s32.totalorder 2, %s38
      // Predicated region
      $region149: #{tpu_custom_call.1} parent=5 // pred_check
        %p1875 = pneg %p1874
      $region150: #{tpu_custom_call.1} parent=5 // pred_check_branch
        %1877 = sbr.rel (%p1875) target = $region152
      $region151: #{tpu_custom_call.1} parent=5 // pred_region
        %s1878 = ssub.s32 %s38, 2
        // Predicated region
        $region153: #{tpu_custom_call.1} parent=151 // pred_check
          %p1879 = pneg %p455
        $region154: #{tpu_custom_call.1} parent=151 // pred_check_branch
          %1881 = sbr.rel (%p1879) target = $region156
        $region155: #{tpu_custom_call.1} parent=151 // pred_region
          %s1882 = sand.u32 %s440, 1
          %s1883 = scalar_lea.sflag [#allocation4], %s1882
          %s1884 = sand.u32 %s440, 1
          %s1885 = smul.addr %s1884, 8
          %s1886 = scalar_lea.vmem [#allocation23], %s1885
          %1887 = dma.done %s1883, 128
        $region156: #{tpu_custom_call.1} parent=151 // pred_fallthru
          _
      $region152: #{tpu_custom_call.1} parent=5 // pred_fallthru
        _
    $region6: #{tpu_custom_call.1} parent=1 // loop_footer
      %s42 = sadd.s32 1, %s38
    $region7: #{tpu_custom_call.1} parent=1 // loop_footer_branch
      %37 = sbr.rel target = $region3
    $region8: #{tpu_custom_call.1} parent=1 // loop_exit
      _
    %1888 = vsyncpa [#allocation3], 1
    %s1889 = scalar_lea.sflag [#allocation3], 1
    %1890 = vsyncpa %s1889, 1
    %1891 = vsyncpa [#allocation6], 1
    %s1892 = scalar_lea.sflag [#allocation6], 1
    %1893 = vsyncpa %s1892, 1
    %1894 = vsyncpa [#allocation9], 1
    %1895 = vsyncpa [#allocation12], 1
    %1896 = vsyncpa [#allocation15], 1
    %1897 = vsyncpa [#allocation18], 1
    %1898 = vsyncpa [#allocation21], 1
    %1899 = vsyncpa [#allocation4], 1
    %s1900 = scalar_lea.sflag [#allocation4], 1
    %1901 = vsyncpa %s1900, 1

</llo_original>
